<compile_context>
chip_gen: v7x
topology: tpu7x:2x2x1
jax: 0.10.0
libtpu: 0.0.40
codegen_flags: <defaults>
</compile_context>

<pallas_src>
import math
import jax
import jax.numpy as jnp
from jax.experimental import pallas as pl
from jax.experimental.pallas import tpu as pltpu


def _sanet_head_kernel(feat_ref, scale_ref, shift_ref, w_ref, b_ref,
                       out_ref, emb_ref):
    # feat_ref : (TB, S, C)   batch tile of channels-last features (native dtype)
    # scale/shift : (1, C)    folded eval-mode BatchNorm3d (norm5) affine
    # w_ref : (C, NCP), b_ref : (1, NCP)   lane-padded classifier Linear
    # out_ref : (1, TB, NCP), emb_ref : (1, TB, C)
    x = feat_ref[...].astype(jnp.float32)                       # (TB, S, C)
    y = jnp.maximum(x * scale_ref[...] + shift_ref[...], 0.0)   # norm5 + ReLU
    # avg_pool3d over the full (last_duration, last_size, last_size) window
    # == mean over all S = D*H*W positions (axis=1).
    emb = jnp.mean(y, axis=1)                                   # (TB, C) f32
    emb_ref[0] = emb
    # TODO(synk): Dropout3d(p=0.8) is identity in eval mode; training-mode
    #             channel dropout is not implemented.
    out = jnp.dot(emb, w_ref[...],
                  preferred_element_type=jnp.float32) + b_ref[...]
    out_ref[0] = out                                            # (TB, NCP)


def sanet_head_pallas(feat_ncdhw, bn_gamma, bn_beta, bn_mean, bn_var,
                      cls_w, cls_b, *, eps=1e-5, batch_tile=None):
    """feat_ncdhw: (N, C, D, H, W) float32/bf16 (output of denseblock4)."""
    N, C, D, H, W = feat_ncdhw.shape
    S = D * H * W
    nc = cls_w.shape[0]
    nc_pad = max(128, 128 * pl.cdiv(nc, 128))   # lane-dense classifier width

    # Glue: NCDHW -> (N, S, C) channels-last so C sits on the 128-lane axis.
    # TODO(synk): this transpose is a separate XLA pass (extra HBM read+write of
    #             the feature tensor); emit channels-last upstream if possible.
    feat = jnp.transpose(feat_ncdhw, (0, 2, 3, 4, 1)).reshape(N, S, C)
    # Keep native dtype (bf16 stays bf16) -> halves the dominant feature DMA.

    # Batch tile: amortize per-step overhead but keep >=2 grid steps (v7x has
    # 2 TensorCores; 'parallel' lets megacore shard them).
    if batch_tile is None:
        batch_tile = 1 if N <= 1 else min(pl.cdiv(N, 2), 128)
    tb = int(batch_tile)
    g = pl.cdiv(N, tb)
    n_pad = g * tb
    if n_pad != N:
        feat = jnp.pad(feat, ((0, n_pad - N), (0, 0), (0, 0)))

    # Fold BN running stats (eval mode): y = x*scale + shift.
    scale1 = (bn_gamma.astype(jnp.float32) /
              jnp.sqrt(bn_var.astype(jnp.float32) + eps))
    shift1 = bn_beta.astype(jnp.float32) - bn_mean.astype(jnp.float32) * scale1
    scale = scale1.reshape(1, C)
    shift = shift1.reshape(1, C)

    # Lane-dense classifier: pad (out) dim from nc -> nc_pad with zeros.
    w = jnp.zeros((C, nc_pad), jnp.float32).at[:, :nc].set(
        cls_w.T.astype(jnp.float32))
    b = jnp.zeros((1, nc_pad), jnp.float32).at[:, :nc].set(
        cls_b.astype(jnp.float32))

    out3, emb3 = pl.pallas_call(
        _sanet_head_kernel,
        out_shape=(jax.ShapeDtypeStruct((g, tb, nc_pad), jnp.float32),
                   jax.ShapeDtypeStruct((g, tb, C), jnp.float32)),
        grid_spec=pltpu.PrefetchScalarGridSpec(
            num_scalar_prefetch=0,
            grid=(g,),
            in_specs=[
                pl.BlockSpec((tb, S, C),   lambda i: (i, 0, 0)),  # features
                pl.BlockSpec((1, C),       lambda i: (0, 0)),     # bn scale (resident)
                pl.BlockSpec((1, C),       lambda i: (0, 0)),     # bn shift (resident)
                pl.BlockSpec((C, nc_pad),  lambda i: (0, 0)),     # classifier W (resident)
                pl.BlockSpec((1, nc_pad),  lambda i: (0, 0)),     # classifier b (resident)
            ],
            out_specs=[
                pl.BlockSpec((1, tb, nc_pad), lambda i: (i, 0, 0)),  # out (lane-dense)
                pl.BlockSpec((1, tb, C),      lambda i: (i, 0, 0)),  # emb (lane-dense)
            ],
        ),
        compiler_params=pltpu.CompilerParams(
            dimension_semantics=("parallel",)),
    )(feat, scale, shift, w, b)

    out = out3.reshape(n_pad, nc_pad)[:N, :nc]
    emb = emb3.reshape(n_pad, C)[:N]
    return out, emb


def sanet_head_reference(feat_ncdhw, bn_gamma, bn_beta, bn_mean, bn_var,
                         cls_w, cls_b, *, eps=1e-5):
    """Pure-JAX reference mirroring the PyTorch ops (eval mode)."""
    x = feat_ncdhw.astype(jnp.float32)
    g = bn_gamma[None, :, None, None, None]
    bta = bn_beta[None, :, None, None, None]
    mu = bn_mean[None, :, None, None, None]
    var = bn_var[None, :, None, None, None]
    x = (x - mu) / jnp.sqrt(var + eps) * g + bta       # norm5
    x = jnp.maximum(x, 0.0)                            # F.relu
    pooled = jnp.mean(x, axis=(2, 3, 4))               # avg_pool3d (full window)
    emb = pooled.reshape(x.shape[0], -1)               # dropout (eval) + view
    out = emb @ cls_w.T + cls_b                        # classifier
    return out, emb


if __name__ == "__main__":
    # Shapes consistent with the module:
    #   sample_duration=32, sample_size=128  ->  last_duration=2, last_size=4
    #   denseblock4 output: (N, 1024, last_duration, last_size, last_size)
    sample_duration, sample_size, num_classes = 32, 128, 2
    last_duration = int(math.ceil(sample_duration / 16))    # 2
    last_size = int(math.floor(sample_size / 32))            # 4
    N, C = 4, 1024                                           # N=4 -> 2 grid steps, TB=2

    key = jax.random.PRNGKey(0)
    kx, kg, kb, km, kv, kw, kbc = jax.random.split(key, 7)

    # Stand-in for the (unavailable) densenet feature extractor output.
    x = jax.random.normal(
        kx, (N, C, last_duration, last_size, last_size), dtype=jnp.float32)

    # norm5 = BatchNorm3d(1024) parameters / running stats (deterministic).
    bn_gamma = 1.0 + 0.1 * jax.random.normal(kg, (C,), dtype=jnp.float32)
    bn_beta = 0.1 * jax.random.normal(kb, (C,), dtype=jnp.float32)
    bn_mean = 0.05 * jax.random.normal(km, (C,), dtype=jnp.float32)
    bn_var = jax.random.uniform(kv, (C,), dtype=jnp.float32,
                                minval=0.5, maxval=1.5)

    # classifier = Linear(1024, num_classes)   (fc1/fc2 are unused in forward)
    cls_w = jax.random.normal(kw, (num_classes, C), dtype=jnp.float32) / \
        jnp.sqrt(jnp.float32(C))
    cls_b = 0.01 * jax.random.normal(kbc, (num_classes,), dtype=jnp.float32)

    out, emb = sanet_head_pallas(x, bn_gamma, bn_beta, bn_mean, bn_var,
                                 cls_w, cls_b)
    jax.block_until_ready((out, emb))

    out_ref, emb_ref = sanet_head_reference(x, bn_gamma, bn_beta, bn_mean,
                                            bn_var, cls_w, cls_b)
    assert out.shape == (N, num_classes) and emb.shape == (N, C)
    assert jnp.allclose(out, out_ref, rtol=1e-4, atol=1e-4)
    assert jnp.allclose(emb, emb_ref, rtol=1e-4, atol=1e-4)

    print("KERNEL_OK")
</pallas_src>

<mosaic_0001>
module attributes {stable_mosaic.version = 11 : i64} {
  func.func @_sanet_head_kernel(%arg0: i32, %arg1: memref<2x32x1024xf32, #tpu.memory_space<vmem>>, %arg2: memref<1x1024xf32, #tpu.memory_space<vmem>>, %arg3: memref<1x1024xf32, #tpu.memory_space<vmem>>, %arg4: memref<1024x128xf32, #tpu.memory_space<vmem>>, %arg5: memref<1x128xf32, #tpu.memory_space<vmem>>, %arg6: memref<1x2x128xf32, #tpu.memory_space<vmem>>, %arg7: memref<1x2x1024xf32, #tpu.memory_space<vmem>>) attributes {dimension_semantics = [#tpu.dimension_semantics<parallel>], iteration_bounds = array<i64: 2>, scalar_prefetch = 0 : i64, scratch_operands = 0 : i64, tpu.core_type = #tpu.core_type<tc>, window_params = [{transform_indices = @transform_0, window_bounds = array<i64: 2, 32, 1024>}, {pipeline_mode = #tpu.pipeline_mode<synchronous>, transform_indices = @transform_1, window_bounds = array<i64: 1, 1024>}, {pipeline_mode = #tpu.pipeline_mode<synchronous>, transform_indices = @transform_2, window_bounds = array<i64: 1, 1024>}, {pipeline_mode = #tpu.pipeline_mode<synchronous>, transform_indices = @transform_3, window_bounds = array<i64: 1024, 128>}, {pipeline_mode = #tpu.pipeline_mode<synchronous>, transform_indices = @transform_4, window_bounds = array<i64: 1, 128>}, {transform_indices = @transform_5, window_bounds = array<i64: 1, 2, 128>}, {transform_indices = @transform_6, window_bounds = array<i64: 1, 2, 1024>}]} {
    %c0 = arith.constant 0 : index
    %c0_0 = arith.constant 0 : index
    %c0_1 = arith.constant 0 : index
    %0 = vector.load %arg1[%c0, %c0_0, %c0_1] : memref<2x32x1024xf32, #tpu.memory_space<vmem>>, vector<2x32x1024xf32>
    %c0_2 = arith.constant 0 : index
    %c0_3 = arith.constant 0 : index
    %1 = vector.load %arg2[%c0_2, %c0_3] : memref<1x1024xf32, #tpu.memory_space<vmem>>, vector<1x1024xf32>
    %2 = vector.shape_cast %1 : vector<1x1024xf32> to vector<1x1x1024xf32>
    %3 = vector.broadcast %2 : vector<1x1x1024xf32> to vector<2x32x1024xf32>
    %4 = arith.mulf %0, %3 : vector<2x32x1024xf32>
    %c0_4 = arith.constant 0 : index
    %c0_5 = arith.constant 0 : index
    %5 = vector.load %arg3[%c0_4, %c0_5] : memref<1x1024xf32, #tpu.memory_space<vmem>>, vector<1x1024xf32>
    %6 = vector.shape_cast %5 : vector<1x1024xf32> to vector<1x1x1024xf32>
    %7 = vector.broadcast %6 : vector<1x1x1024xf32> to vector<2x32x1024xf32>
    %8 = arith.addf %4, %7 : vector<2x32x1024xf32>
    %cst = arith.constant 0.000000e+00 : f32
    %9 = vector.broadcast %cst : f32 to vector<2x32x1024xf32>
    %10 = arith.maximumf %8, %9 : vector<2x32x1024xf32>
    %cst_6 = arith.constant dense<0.000000e+00> : vector<2x1024xf32>
    %11 = vector.multi_reduction <add>, %10, %cst_6 [1] : vector<2x32x1024xf32> to vector<2x1024xf32>
    %cst_7 = arith.constant 3.200000e+01 : f32
    %12 = vector.broadcast %cst_7 : f32 to vector<2x1024xf32>
    %13 = arith.divf %11, %12 : vector<2x1024xf32>
    %c0_8 = arith.constant 0 : index
    %c0_9 = arith.constant 0 : index
    %c0_10 = arith.constant 0 : index
    %14 = vector.load %arg7[%c0_8, %c0_9, %c0_10] : memref<1x2x1024xf32, #tpu.memory_space<vmem>>, vector<1x2x1024xf32>
    %15 = vector.shape_cast %14 : vector<1x2x1024xf32> to vector<2x1024xf32>
    %16 = vector.shape_cast %13 : vector<2x1024xf32> to vector<1x2x1024xf32>
    tpu.vector_store %arg7[%c0_8, %c0_9, %c0_10], %16 {strides = array<i32>} : memref<1x2x1024xf32, #tpu.memory_space<vmem>>, vector<1x2x1024xf32>,
    %c0_11 = arith.constant 0 : index
    %c0_12 = arith.constant 0 : index
    %17 = vector.load %arg4[%c0_11, %c0_12] : memref<1024x128xf32, #tpu.memory_space<vmem>>, vector<1024x128xf32>
    %cst_13 = arith.constant dense<0.000000e+00> : vector<2x128xf32>
    %18 = tpu.matmul %13, %17, %cst_13 {dimension_numbers = #tpu.dot_dimension_numbers<[1], [0], [0], [1], [0, 0, 1, 1], [], []>} : vector<2x1024xf32>, vector<1024x128xf32>, vector<2x128xf32> -> vector<2x128xf32>
    %c0_14 = arith.constant 0 : index
    %c0_15 = arith.constant 0 : index
    %19 = vector.load %arg5[%c0_14, %c0_15] : memref<1x128xf32, #tpu.memory_space<vmem>>, vector<1x128xf32>
    %20 = vector.broadcast %19 : vector<1x128xf32> to vector<2x128xf32>
    %21 = arith.addf %18, %20 : vector<2x128xf32>
    %c0_16 = arith.constant 0 : index
    %c0_17 = arith.constant 0 : index
    %c0_18 = arith.constant 0 : index
    %22 = vector.load %arg6[%c0_16, %c0_17, %c0_18] : memref<1x2x128xf32, #tpu.memory_space<vmem>>, vector<1x2x128xf32>
    %23 = vector.shape_cast %22 : vector<1x2x128xf32> to vector<2x128xf32>
    %24 = vector.shape_cast %21 : vector<2x128xf32> to vector<1x2x128xf32>
    tpu.vector_store %arg6[%c0_16, %c0_17, %c0_18], %24 {strides = array<i32>} : memref<1x2x128xf32, #tpu.memory_space<vmem>>, vector<1x2x128xf32>,
    return
  }
  func.func @transform_0(%arg0: i32) -> (i32, i32, i32) {
    %c0_i32 = arith.constant 0 : i32
    %c0_i32_0 = arith.constant 0 : i32
    %c0_i32_1 = arith.constant 0 : i32
    return %arg0, %c0_i32, %c0_i32_0 : i32, i32, i32
  }
  func.func @transform_1(%arg0: i32) -> (i32, i32) {
    %c0_i32 = arith.constant 0 : i32
    %c0_i32_0 = arith.constant 0 : i32
    %c0_i32_1 = arith.constant 0 : i32
    return %c0_i32, %c0_i32_0 : i32, i32
  }
  func.func @transform_2(%arg0: i32) -> (i32, i32) {
    %c0_i32 = arith.constant 0 : i32
    %c0_i32_0 = arith.constant 0 : i32
    %c0_i32_1 = arith.constant 0 : i32
    return %c0_i32, %c0_i32_0 : i32, i32
  }
  func.func @transform_3(%arg0: i32) -> (i32, i32) {
    %c0_i32 = arith.constant 0 : i32
    %c0_i32_0 = arith.constant 0 : i32
    %c0_i32_1 = arith.constant 0 : i32
    return %c0_i32, %c0_i32_0 : i32, i32
  }
  func.func @transform_4(%arg0: i32) -> (i32, i32) {
    %c0_i32 = arith.constant 0 : i32
    %c0_i32_0 = arith.constant 0 : i32
    %c0_i32_1 = arith.constant 0 : i32
    return %c0_i32, %c0_i32_0 : i32, i32
  }
  func.func @transform_5(%arg0: i32) -> (i32, i32, i32) {
    %c0_i32 = arith.constant 0 : i32
    %c0_i32_0 = arith.constant 0 : i32
    %c0_i32_1 = arith.constant 0 : i32
    return %arg0, %c0_i32, %c0_i32_0 : i32, i32, i32
  }
  func.func @transform_6(%arg0: i32) -> (i32, i32, i32) {
    %c0_i32 = arith.constant 0 : i32
    %c0_i32_0 = arith.constant 0 : i32
    %c0_i32_1 = arith.constant 0 : i32
    return %arg0, %c0_i32, %c0_i32_0 : i32, i32, i32
  }
}

</mosaic_0001>

<llo_original>
// kernel: tpu_custom_call.1
$region0: #{tpu_custom_call.1}
  #allocation0 [shape = 'u32[]', space=smem, size = 0x4, offset = 0x4, fixed_abs, tag = 'smem constant byte address 0x4 - core index']
  #allocation1 [shape = 'u32[144,128]{1,0:T(1,128)}', space=vmem, size = 0x12000, scoped, tag = 'internal scratch']
  %s0 = inlined_call_operand.hbm [shape: f32[4,32,1024], index: 0, kind: input, shape index: {}]
  %s1 = inlined_call_operand.hbm [shape: f32[1,1024], index: 1, kind: input, shape index: {}]
  %s2 = inlined_call_operand.hbm [shape: f32[1,1024], index: 2, kind: input, shape index: {}]
  %s3 = inlined_call_operand.hbm [shape: f32[1024,128], index: 3, kind: input, shape index: {}]
  %s4 = inlined_call_operand.vmem [shape: f32[1,128], index: 4, kind: input, shape index: {}]
  %s5 = inlined_call_operand.hbm [shape: f32[2,2,128], index: 5, kind: output, shape index: {0}]
  %s6 = inlined_call_operand.hbm [shape: f32[2,2,1024], index: 6, kind: output, shape index: {1}]
  %7 = xla_tuple %s5, %s6
  %s8 = sld [smem:[#allocation0]]
  $region77: #{tpu_custom_call.1} parent=0
    _
  %s10 = ssub.s32 1, %s8
  %s11 = scalar_select 0, %s10, %s8
  $region1: #{tpu_custom_call.1} parent=0
    #allocation2 [shape = 'u8[524288]{0}', space=vmem, size = 0x80000, scoped, tag = 'input window, operand 0']
    #allocation3 [shape = 's32[2]{0}', space=sflag, size = 0x8, scoped, tag = 'scoped memory for tpu_custom_call.1']
    #allocation4 [shape = 's32[2]{0}', space=sflag, size = 0x8, scoped, tag = 'scoped memory for tpu_custom_call.1']
    #allocation5 [shape = 'u8[4096]{0}', space=vmem, size = 0x1000, scoped, tag = 'input window, operand 1, single buffered']
    #allocation6 [shape = 's32[1]{0}', space=sflag, size = 0x4, scoped, tag = 'scoped memory for tpu_custom_call.1']
    #allocation7 [shape = 'u8[4096]{0}', space=vmem, size = 0x1000, scoped, tag = 'input window, operand 2, single buffered']
    #allocation8 [shape = 'u8[524288]{0}', space=vmem, size = 0x80000, scoped, tag = 'input window, operand 3, single buffered']
    #allocation9 [shape = 's32[1]{0}', space=sflag, size = 0x4, scoped, tag = 'scoped memory for tpu_custom_call.1']
    #allocation10 [shape = 'u8[2048]{0}', space=vmem, size = 0x800, scoped, tag = 'output window, operand 0']
    #allocation11 [shape = 'u8[16384]{0}', space=vmem, size = 0x4000, scoped, tag = 'output window, operand 1']
    #allocation12 [shape = 's32[2]{0}', space=sflag, size = 0x8, scoped, tag = 'scoped memory for tpu_custom_call.1']
    %12 = vsyncpa [#allocation3], 0
    %s13 = scalar_lea.sflag [#allocation3], 1
    %14 = vsyncpa %s13, 0
    %15 = vsyncpa [#allocation6], 0
    %16 = vsyncpa [#allocation9], 0
    %17 = vsyncpa [#allocation4], 0
    %s18 = scalar_lea.sflag [#allocation4], 1
    %19 = vsyncpa %s18, 0
    %20 = vsyncpa [#allocation12], 0
    %s21 = scalar_lea.sflag [#allocation12], 1
    %22 = vsyncpa %s21, 0
    loop: start=0, step=1, limit=4
    $region2: #{tpu_custom_call.1} parent=1 // loop_pre_header
      _
    $region3: #{tpu_custom_call.1} parent=1 // loop_header
      %s24 = sphi 0, %s28
      %p25 = scmp.ge.s32.totalorder %s24, 4
      %s34 = sphi 0, %s36
      %s37 = sphi 0, %s34
      %s38 = sphi 0, %s37
      %s54 = sphi 0, %s38
      %s58 = sphi 0, %s58
      %s60 = sphi 0, %s58
      %s61 = sphi 0, %s60
      %s75 = sphi 0, %s61
      %s79 = sphi 0, %s79
      %s81 = sphi 0, %s79
      %s82 = sphi 0, %s81
      %s96 = sphi 0, %s82
      %s100 = sphi 0, %s100
      %s102 = sphi 0, %s100
      %s103 = sphi 0, %s102
      %s117 = sphi 0, %s103
      %s121 = sphi 0, %s121
      %s123 = sphi 0, %s121
      %s124 = sphi 0, %s123
      %s138 = sphi 0, %s124
      %s144 = sphi 0, %s146
      %s147 = sphi 0, %s144
      %s148 = sphi 0, %s147
      %s164 = sphi 0, %s148
      %s170 = sphi 0, %s172
      %s173 = sphi 0, %s170
      %s174 = sphi 0, %s173
      %s190 = sphi 0, %s174
    $region4: #{tpu_custom_call.1} parent=1 // loop_header_branch
      %27 = sbr.rel (%p25) target = $region8
    $region5: #{tpu_custom_call.1} parent=1 // loop_body
      %s29 = ssub.s32 %s24, 1
      %s30 = ssub.s32 %s24, 2
      %s31 = sadd.s32 %s24, 1
      %s32 = ssub.s32 %s24, %s31
      %p33 = scmp.eq.s32.totalorder %s32, 0
      %s35 = sadd.s32 %s34, 1
      %s36 = scalar_select %p33, %s34, %s35
      %p39 = pneg %p33
      %p40 = scmp.eq.s32.totalorder %s24, 1
      %p41 = por %p39, %p40
      %p42 = scmp.ne.s32.totalorder %s34, %s37
      %p43 = scmp.eq.s32.totalorder %s24, 0
      %p44 = por %p42, %p43
      %p45 = scmp.ne.s32.totalorder %s34, %s37
      %p46 = scmp.eq.s32.totalorder %s29, 1
      %p47 = por %p45, %p46
      %p48 = scmp.ne.s32.totalorder %s37, %s38
      %p49 = scmp.eq.s32.totalorder %s29, 0
      %p50 = por %p48, %p49
      %p51 = scmp.ne.s32.totalorder %s37, %s38
      %p52 = scmp.eq.s32.totalorder %s30, 1
      %p53 = por %p51, %p52
      %p55 = scmp.ne.s32.totalorder %s38, %s54
      %p56 = scmp.eq.s32.totalorder %s30, 0
      %p57 = por %p55, %p56
      %s59 = sadd.s32 %s58, 1
      %p62 = scmp.eq.s32.totalorder %s24, 1
      %p63 = scmp.ne.s32.totalorder %s58, %s60
      %p64 = scmp.eq.s32.totalorder %s24, 0
      %p65 = por %p63, %p64
      %p66 = scmp.ne.s32.totalorder %s58, %s60
      %p67 = scmp.eq.s32.totalorder %s29, 1
      %p68 = por %p66, %p67
      %p69 = scmp.ne.s32.totalorder %s60, %s61
      %p70 = scmp.eq.s32.totalorder %s29, 0
      %p71 = por %p69, %p70
      %p72 = scmp.ne.s32.totalorder %s60, %s61
      %p73 = scmp.eq.s32.totalorder %s30, 1
      %p74 = por %p72, %p73
      %p76 = scmp.ne.s32.totalorder %s61, %s75
      %p77 = scmp.eq.s32.totalorder %s30, 0
      %p78 = por %p76, %p77
      %s80 = sadd.s32 %s79, 1
      %p83 = scmp.eq.s32.totalorder %s24, 1
      %p84 = scmp.ne.s32.totalorder %s79, %s81
      %p85 = scmp.eq.s32.totalorder %s24, 0
      %p86 = por %p84, %p85
      %p87 = scmp.ne.s32.totalorder %s79, %s81
      %p88 = scmp.eq.s32.totalorder %s29, 1
      %p89 = por %p87, %p88
      %p90 = scmp.ne.s32.totalorder %s81, %s82
      %p91 = scmp.eq.s32.totalorder %s29, 0
      %p92 = por %p90, %p91
      %p93 = scmp.ne.s32.totalorder %s81, %s82
      %p94 = scmp.eq.s32.totalorder %s30, 1
      %p95 = por %p93, %p94
      %p97 = scmp.ne.s32.totalorder %s82, %s96
      %p98 = scmp.eq.s32.totalorder %s30, 0
      %p99 = por %p97, %p98
      %s101 = sadd.s32 %s100, 1
      %p104 = scmp.eq.s32.totalorder %s24, 1
      %p105 = scmp.ne.s32.totalorder %s100, %s102
      %p106 = scmp.eq.s32.totalorder %s24, 0
      %p107 = por %p105, %p106
      %p108 = scmp.ne.s32.totalorder %s100, %s102
      %p109 = scmp.eq.s32.totalorder %s29, 1
      %p110 = por %p108, %p109
      %p111 = scmp.ne.s32.totalorder %s102, %s103
      %p112 = scmp.eq.s32.totalorder %s29, 0
      %p113 = por %p111, %p112
      %p114 = scmp.ne.s32.totalorder %s102, %s103
      %p115 = scmp.eq.s32.totalorder %s30, 1
      %p116 = por %p114, %p115
      %p118 = scmp.ne.s32.totalorder %s103, %s117
      %p119 = scmp.eq.s32.totalorder %s30, 0
      %p120 = por %p118, %p119
      %s122 = sadd.s32 %s121, 1
      %p125 = scmp.eq.s32.totalorder %s24, 1
      %p126 = scmp.ne.s32.totalorder %s121, %s123
      %p127 = scmp.eq.s32.totalorder %s24, 0
      %p128 = por %p126, %p127
      %p129 = scmp.ne.s32.totalorder %s121, %s123
      %p130 = scmp.eq.s32.totalorder %s29, 1
      %p131 = por %p129, %p130
      %p132 = scmp.ne.s32.totalorder %s123, %s124
      %p133 = scmp.eq.s32.totalorder %s29, 0
      %p134 = por %p132, %p133
      %p135 = scmp.ne.s32.totalorder %s123, %s124
      %p136 = scmp.eq.s32.totalorder %s30, 1
      %p137 = por %p135, %p136
      %p139 = scmp.ne.s32.totalorder %s124, %s138
      %p140 = scmp.eq.s32.totalorder %s30, 0
      %p141 = por %p139, %p140
      %s142 = ssub.s32 %s24, %s31
      %p143 = scmp.eq.s32.totalorder %s142, 0
      %s145 = sadd.s32 %s144, 1
      %s146 = scalar_select %p143, %s144, %s145
      %p149 = pneg %p143
      %p150 = scmp.eq.s32.totalorder %s24, 1
      %p151 = por %p149, %p150
      %p152 = scmp.ne.s32.totalorder %s144, %s147
      %p153 = scmp.eq.s32.totalorder %s24, 0
      %p154 = por %p152, %p153
      %p155 = scmp.ne.s32.totalorder %s144, %s147
      %p156 = scmp.eq.s32.totalorder %s29, 1
      %p157 = por %p155, %p156
      %p158 = scmp.ne.s32.totalorder %s147, %s148
      %p159 = scmp.eq.s32.totalorder %s29, 0
      %p160 = por %p158, %p159
      %p161 = scmp.ne.s32.totalorder %s147, %s148
      %p162 = scmp.eq.s32.totalorder %s30, 1
      %p163 = por %p161, %p162
      %p165 = scmp.ne.s32.totalorder %s148, %s164
      %p166 = scmp.eq.s32.totalorder %s30, 0
      %p167 = por %p165, %p166
      %s168 = ssub.s32 %s24, %s31
      %p169 = scmp.eq.s32.totalorder %s168, 0
      %s171 = sadd.s32 %s170, 1
      %s172 = scalar_select %p169, %s170, %s171
      %p175 = pneg %p169
      %p176 = scmp.eq.s32.totalorder %s24, 1
      %p177 = por %p175, %p176
      %p178 = scmp.ne.s32.totalorder %s170, %s173
      %p179 = scmp.eq.s32.totalorder %s24, 0
      %p180 = por %p178, %p179
      %p181 = scmp.ne.s32.totalorder %s170, %s173
      %p182 = scmp.eq.s32.totalorder %s29, 1
      %p183 = por %p181, %p182
      %p184 = scmp.ne.s32.totalorder %s173, %s174
      %p185 = scmp.eq.s32.totalorder %s29, 0
      %p186 = por %p184, %p185
      %p187 = scmp.ne.s32.totalorder %s173, %s174
      %p188 = scmp.eq.s32.totalorder %s30, 1
      %p189 = por %p187, %p188
      %p191 = scmp.ne.s32.totalorder %s174, %s190
      %p192 = scmp.eq.s32.totalorder %s30, 0
      %p193 = por %p191, %p192
      %p194 = scmp.le.s32.totalorder 1, %s24
      %p195 = scmp.lt.s32.totalorder %s24, 3
      %p196 = pnand %p194, %p195
      %p197 = pneg %p196
      // Predicated region
      $region9: #{tpu_custom_call.1} parent=5 // pred_check
        _
      $region10: #{tpu_custom_call.1} parent=5 // pred_check_branch
        %199 = sbr.rel (%p196) target = $region12
      $region11: #{tpu_custom_call.1} parent=5 // pred_region
        %s200 = ssub.s32 %s24, 1
        // Predicated region
        $region13: #{tpu_custom_call.1} parent=11 // pred_check
          %p201 = pneg %p71
        $region14: #{tpu_custom_call.1} parent=11 // pred_check_branch
          %203 = sbr.rel (%p201) target = $region16
        $region15: #{tpu_custom_call.1} parent=11 // pred_region
          %s205 = ssub.s32 128, 128
          %206 = vsyncadd [#allocation6], %s205
          %s208 = sshll.u32 [#allocation5], 4
          %s209 = int_to_ptr.vmem [resolvable:$true] %s208
          %211 = dma.hbm_to_vmem [thread:$0]  %s1, 128, %s209, [#allocation6]
        $region16: #{tpu_custom_call.1} parent=11 // pred_fallthru
          _
        // Predicated region
        $region17: #{tpu_custom_call.1} parent=11 // pred_check
          %p212 = pneg %p92
        $region18: #{tpu_custom_call.1} parent=11 // pred_check_branch
          %214 = sbr.rel (%p212) target = $region20
        $region19: #{tpu_custom_call.1} parent=11 // pred_region
          %s216 = ssub.s32 128, 128
          %217 = vsyncadd [#allocation6], %s216
          %s219 = sshll.u32 [#allocation7], 4
          %s220 = int_to_ptr.vmem [resolvable:$true] %s219
          %222 = dma.hbm_to_vmem [thread:$0]  %s2, 128, %s220, [#allocation6]
        $region20: #{tpu_custom_call.1} parent=11 // pred_fallthru
          _
        // Predicated region
        $region21: #{tpu_custom_call.1} parent=11 // pred_check
          %p223 = pneg %p113
        $region22: #{tpu_custom_call.1} parent=11 // pred_check_branch
          %225 = sbr.rel (%p223) target = $region24
        $region23: #{tpu_custom_call.1} parent=11 // pred_region
          %s227 = ssub.s32 16384, 16384
          %228 = vsyncadd [#allocation9], %s227
          %s229 = sshll.u32 [#allocation8], 4
          %s230 = int_to_ptr.vmem [resolvable:$true] %s229
          %235 = dma.hbm_to_vmem [thread:$0]  %s3, 16384, %s230, [#allocation9], 128, 128, 8
        $region24: #{tpu_custom_call.1} parent=11 // pred_fallthru
          _
        // Predicated region
        $region25: #{tpu_custom_call.1} parent=11 // pred_check
          %p236 = pneg %p134
        $region26: #{tpu_custom_call.1} parent=11 // pred_check_branch
          %238 = sbr.rel (%p236) target = $region28
        $region27: #{tpu_custom_call.1} parent=11 // pred_region
          _
        $region28: #{tpu_custom_call.1} parent=11 // pred_fallthru
          _
      $region12: #{tpu_custom_call.1} parent=5 // pred_fallthru
        _
      %p239 = scmp.lt.s32.totalorder %s24, 2
      // Predicated region
      $region29: #{tpu_custom_call.1} parent=5 // pred_check
        %p240 = pneg %p239
      $region30: #{tpu_custom_call.1} parent=5 // pred_check_branch
        %242 = sbr.rel (%p240) target = $region32
      $region31: #{tpu_custom_call.1} parent=5 // pred_region
        // Predicated region
        $region33: #{tpu_custom_call.1} parent=31 // pred_check
          %p243 = pneg %p44
        $region34: #{tpu_custom_call.1} parent=31 // pred_check_branch
          %245 = sbr.rel (%p243) target = $region36
        $region35: #{tpu_custom_call.1} parent=31 // pred_region
          %s246 = sand.u32 %s34, 1
          %s247 = scalar_lea.sflag [#allocation3], %s246
          %s248 = sand.u32 %s34, 1
          %s249 = smul.addr %s248, 512
          %s250 = scalar_lea.vmem [#allocation2], %s249
          %s251 = smul.u32 2, %s24
          %s253 = ssub.s32 8192, 8192
          %254 = vsyncadd %s247, %s253
          %s255 = smul.addr %s251, 32
          %s256 = smul.addr %s255, 128
          %s257 = scalar_lea.hbm %s0, %s256
          %s258 = sshll.u32 %s250, 4
          %s259 = int_to_ptr.vmem [resolvable:$true] %s258
          %264 = dma.hbm_to_vmem [thread:$0]  %s257, 8192, %s259, %s247, 1024, 1024, 64
        $region36: #{tpu_custom_call.1} parent=31 // pred_fallthru
          _
      $region32: #{tpu_custom_call.1} parent=5 // pred_fallthru
        _
      %p265 = scmp.le.s32.totalorder 1, %s24
      %p266 = scmp.lt.s32.totalorder %s24, 3
      %p267 = pnand %p265, %p266
      %p268 = pneg %p267
      // Predicated region
      $region37: #{tpu_custom_call.1} parent=5 // pred_check
        _
      $region38: #{tpu_custom_call.1} parent=5 // pred_check_branch
        %270 = sbr.rel (%p267) target = $region40
      $region39: #{tpu_custom_call.1} parent=5 // pred_region
        %s271 = ssub.s32 %s24, 1
        %s272 = sand.u32 %s37, 1
        %s273 = scalar_lea.sflag [#allocation3], %s272
        %s274 = sand.u32 %s37, 1
        %s275 = smul.addr %s274, 512
        %s276 = scalar_lea.vmem [#allocation2], %s275
        // Predicated region
        $region41: #{tpu_custom_call.1} parent=39 // pred_check
          %p277 = pneg %p50
        $region42: #{tpu_custom_call.1} parent=39 // pred_check_branch
          %279 = sbr.rel (%p277) target = $region44
        $region43: #{tpu_custom_call.1} parent=39 // pred_region
          %280 = dma.done %s273, 8192
        $region44: #{tpu_custom_call.1} parent=39 // pred_fallthru
          _
        // Predicated region
        $region45: #{tpu_custom_call.1} parent=39 // pred_check
          %p281 = pneg %p71
        $region46: #{tpu_custom_call.1} parent=39 // pred_check_branch
          %283 = sbr.rel (%p281) target = $region48
        $region47: #{tpu_custom_call.1} parent=39 // pred_region
          %284 = dma.done [#allocation6], 128
        $region48: #{tpu_custom_call.1} parent=39 // pred_fallthru
          _
        // Predicated region
        $region49: #{tpu_custom_call.1} parent=39 // pred_check
          %p285 = pneg %p92
        $region50: #{tpu_custom_call.1} parent=39 // pred_check_branch
          %287 = sbr.rel (%p285) target = $region52
        $region51: #{tpu_custom_call.1} parent=39 // pred_region
          %288 = dma.done [#allocation6], 128
        $region52: #{tpu_custom_call.1} parent=39 // pred_fallthru
          _
        // Predicated region
        $region53: #{tpu_custom_call.1} parent=39 // pred_check
          %p289 = pneg %p113
        $region54: #{tpu_custom_call.1} parent=39 // pred_check_branch
          %291 = sbr.rel (%p289) target = $region56
        $region55: #{tpu_custom_call.1} parent=39 // pred_region
          %292 = dma.done [#allocation9], 16384
        $region56: #{tpu_custom_call.1} parent=39 // pred_fallthru
          _
        %s293 = sand.u32 %s37, 1
        %s294 = scalar_lea.sflag [#allocation3], %s293
        %s295 = sand.u32 %s37, 1
        %s296 = smul.addr %s295, 512
        %s297 = scalar_lea.vmem [#allocation2], %s296
        %p298 = pneg %p50
        %p299 = pneg %p47
        %p300 = pneg %p71
        %p301 = pneg %p68
        %p302 = pneg %p92
        %p303 = pneg %p89
        %p304 = pneg %p113
        %p305 = pneg %p110
        %p306 = pneg %p134
        %p307 = pneg %p131
        %p308 = pneg %p160
        %p309 = pneg %p157
        %s310 = sand.u32 %s147, 1
        %s311 = scalar_lea.sflag [#allocation4], %s310
        %s312 = sand.u32 %s147, 1
        %s313 = smul.addr %s312, 2
        %s314 = scalar_lea.vmem [#allocation10], %s313
        %p315 = pneg %p186
        %p316 = pneg %p183
        %s317 = sand.u32 %s173, 1
        %s318 = scalar_lea.sflag [#allocation12], %s317
        %s319 = sand.u32 %s173, 1
        %s320 = smul.addr %s319, 16
        %s321 = scalar_lea.vmem [#allocation11], %s320
        %s322 = smul.u32 2, %s29
        %v323 = vld [vmem:[%s276] sm:$0xff]
        %v324 = vld [vmem:[%s276 + $0x8] sm:$0xff]
        %v325 = vld [vmem:[%s276 + $0x10] sm:$0xff]
        %v326 = vld [vmem:[%s276 + $0x18] sm:$0xff]
        %v327 = vld [vmem:[%s276 + $0x20] sm:$0xff]
        %v328 = vld [vmem:[%s276 + $0x28] sm:$0xff]
        %v329 = vld [vmem:[%s276 + $0x30] sm:$0xff]
        %v330 = vld [vmem:[%s276 + $0x38] sm:$0xff]
        %v331 = vld [vmem:[%s276 + $0x40] sm:$0xff]
        %v332 = vld [vmem:[%s276 + $0x48] sm:$0xff]
        %v333 = vld [vmem:[%s276 + $0x50] sm:$0xff]
        %v334 = vld [vmem:[%s276 + $0x58] sm:$0xff]
        %v335 = vld [vmem:[%s276 + $0x60] sm:$0xff]
        %v336 = vld [vmem:[%s276 + $0x68] sm:$0xff]
        %v337 = vld [vmem:[%s276 + $0x70] sm:$0xff]
        %v338 = vld [vmem:[%s276 + $0x78] sm:$0xff]
        %v339 = vld [vmem:[%s276 + $0x80] sm:$0xff]
        %v340 = vld [vmem:[%s276 + $0x88] sm:$0xff]
        %v341 = vld [vmem:[%s276 + $0x90] sm:$0xff]
        %v342 = vld [vmem:[%s276 + $0x98] sm:$0xff]
        %v343 = vld [vmem:[%s276 + $0xa0] sm:$0xff]
        %v344 = vld [vmem:[%s276 + $0xa8] sm:$0xff]
        %v345 = vld [vmem:[%s276 + $0xb0] sm:$0xff]
        %v346 = vld [vmem:[%s276 + $0xb8] sm:$0xff]
        %v347 = vld [vmem:[%s276 + $0xc0] sm:$0xff]
        %v348 = vld [vmem:[%s276 + $0xc8] sm:$0xff]
        %v349 = vld [vmem:[%s276 + $0xd0] sm:$0xff]
        %v350 = vld [vmem:[%s276 + $0xd8] sm:$0xff]
        %v351 = vld [vmem:[%s276 + $0xe0] sm:$0xff]
        %v352 = vld [vmem:[%s276 + $0xe8] sm:$0xff]
        %v353 = vld [vmem:[%s276 + $0xf0] sm:$0xff]
        %v354 = vld [vmem:[%s276 + $0xf8] sm:$0xff]
        %v355 = vld [vmem:[%s276 + $0x100] sm:$0xff]
        %v356 = vld [vmem:[%s276 + $0x108] sm:$0xff]
        %v357 = vld [vmem:[%s276 + $0x110] sm:$0xff]
        %v358 = vld [vmem:[%s276 + $0x118] sm:$0xff]
        %v359 = vld [vmem:[%s276 + $0x120] sm:$0xff]
        %v360 = vld [vmem:[%s276 + $0x128] sm:$0xff]
        %v361 = vld [vmem:[%s276 + $0x130] sm:$0xff]
        %v362 = vld [vmem:[%s276 + $0x138] sm:$0xff]
        %v363 = vld [vmem:[%s276 + $0x140] sm:$0xff]
        %v364 = vld [vmem:[%s276 + $0x148] sm:$0xff]
        %v365 = vld [vmem:[%s276 + $0x150] sm:$0xff]
        %v366 = vld [vmem:[%s276 + $0x158] sm:$0xff]
        %v367 = vld [vmem:[%s276 + $0x160] sm:$0xff]
        %v368 = vld [vmem:[%s276 + $0x168] sm:$0xff]
        %v369 = vld [vmem:[%s276 + $0x170] sm:$0xff]
        %v370 = vld [vmem:[%s276 + $0x178] sm:$0xff]
        %v371 = vld [vmem:[%s276 + $0x180] sm:$0xff]
        %v372 = vld [vmem:[%s276 + $0x188] sm:$0xff]
        %v373 = vld [vmem:[%s276 + $0x190] sm:$0xff]
        %v374 = vld [vmem:[%s276 + $0x198] sm:$0xff]
        %v375 = vld [vmem:[%s276 + $0x1a0] sm:$0xff]
        %v376 = vld [vmem:[%s276 + $0x1a8] sm:$0xff]
        %v377 = vld [vmem:[%s276 + $0x1b0] sm:$0xff]
        %v378 = vld [vmem:[%s276 + $0x1b8] sm:$0xff]
        %v379 = vld [vmem:[%s276 + $0x1c0] sm:$0xff]
        %v380 = vld [vmem:[%s276 + $0x1c8] sm:$0xff]
        %v381 = vld [vmem:[%s276 + $0x1d0] sm:$0xff]
        %v382 = vld [vmem:[%s276 + $0x1d8] sm:$0xff]
        %v383 = vld [vmem:[%s276 + $0x1e0] sm:$0xff]
        %v384 = vld [vmem:[%s276 + $0x1e8] sm:$0xff]
        %v385 = vld [vmem:[%s276 + $0x1f0] sm:$0xff]
        %v386 = vld [vmem:[%s276 + $0x1f8] sm:$0xff]
        %v387 = vld [vmem:[#allocation5] sm:$0xff]
        %v389 = vlaneseq
        %v390 = vshrl.u32 %v389, 7
        %v391 = vsub.s32 0, %v390
        %v392 = vrot.slane %v387, %v391
        %v393 = vlaneseq
        %v394 = vshrl.u32 %v393, 7
        %v395 = vsub.s32 1, %v394
        %v396 = vrot.slane %v387, %v395
        %v397 = vlaneseq
        %v398 = vshrl.u32 %v397, 7
        %v399 = vsub.s32 2, %v398
        %v400 = vrot.slane %v387, %v399
        %v401 = vlaneseq
        %v402 = vshrl.u32 %v401, 7
        %v403 = vsub.s32 3, %v402
        %v404 = vrot.slane %v387, %v403
        %v405 = vlaneseq
        %v406 = vshrl.u32 %v405, 7
        %v407 = vsub.s32 4, %v406
        %v408 = vrot.slane %v387, %v407
        %v409 = vlaneseq
        %v410 = vshrl.u32 %v409, 7
        %v411 = vsub.s32 5, %v410
        %v412 = vrot.slane %v387, %v411
        %v413 = vlaneseq
        %v414 = vshrl.u32 %v413, 7
        %v415 = vsub.s32 6, %v414
        %v416 = vrot.slane %v387, %v415
        %v417 = vlaneseq
        %v418 = vshrl.u32 %v417, 7
        %v419 = vsub.s32 7, %v418
        %v420 = vrot.slane %v387, %v419
        %v429 = vmul.f32 %v323, %v392
        %v430 = vmul.f32 %v324, %v396
        %v431 = vmul.f32 %v325, %v400
        %v432 = vmul.f32 %v326, %v404
        %v433 = vmul.f32 %v327, %v408
        %v434 = vmul.f32 %v328, %v412
        %v435 = vmul.f32 %v329, %v416
        %v436 = vmul.f32 %v330, %v420
        %v437 = vmul.f32 %v331, %v392
        %v438 = vmul.f32 %v332, %v396
        %v439 = vmul.f32 %v333, %v400
        %v440 = vmul.f32 %v334, %v404
        %v441 = vmul.f32 %v335, %v408
        %v442 = vmul.f32 %v336, %v412
        %v443 = vmul.f32 %v337, %v416
        %v444 = vmul.f32 %v338, %v420
        %v445 = vmul.f32 %v339, %v392
        %v446 = vmul.f32 %v340, %v396
        %v447 = vmul.f32 %v341, %v400
        %v448 = vmul.f32 %v342, %v404
        %v449 = vmul.f32 %v343, %v408
        %v450 = vmul.f32 %v344, %v412
        %v451 = vmul.f32 %v345, %v416
        %v452 = vmul.f32 %v346, %v420
        %v453 = vmul.f32 %v347, %v392
        %v454 = vmul.f32 %v348, %v396
        %v455 = vmul.f32 %v349, %v400
        %v456 = vmul.f32 %v350, %v404
        %v457 = vmul.f32 %v351, %v408
        %v458 = vmul.f32 %v352, %v412
        %v459 = vmul.f32 %v353, %v416
        %v460 = vmul.f32 %v354, %v420
        %v461 = vmul.f32 %v355, %v392
        %v462 = vmul.f32 %v356, %v396
        %v463 = vmul.f32 %v357, %v400
        %v464 = vmul.f32 %v358, %v404
        %v465 = vmul.f32 %v359, %v408
        %v466 = vmul.f32 %v360, %v412
        %v467 = vmul.f32 %v361, %v416
        %v468 = vmul.f32 %v362, %v420
        %v469 = vmul.f32 %v363, %v392
        %v470 = vmul.f32 %v364, %v396
        %v471 = vmul.f32 %v365, %v400
        %v472 = vmul.f32 %v366, %v404
        %v473 = vmul.f32 %v367, %v408
        %v474 = vmul.f32 %v368, %v412
        %v475 = vmul.f32 %v369, %v416
        %v476 = vmul.f32 %v370, %v420
        %v477 = vmul.f32 %v371, %v392
        %v478 = vmul.f32 %v372, %v396
        %v479 = vmul.f32 %v373, %v400
        %v480 = vmul.f32 %v374, %v404
        %v481 = vmul.f32 %v375, %v408
        %v482 = vmul.f32 %v376, %v412
        %v483 = vmul.f32 %v377, %v416
        %v484 = vmul.f32 %v378, %v420
        %v485 = vmul.f32 %v379, %v392
        %v486 = vmul.f32 %v380, %v396
        %v487 = vmul.f32 %v381, %v400
        %v488 = vmul.f32 %v382, %v404
        %v489 = vmul.f32 %v383, %v408
        %v490 = vmul.f32 %v384, %v412
        %v491 = vmul.f32 %v385, %v416
        %v492 = vmul.f32 %v386, %v420
        %v493 = vld [vmem:[#allocation7] sm:$0xff]
        %v495 = vlaneseq
        %v496 = vshrl.u32 %v495, 7
        %v497 = vsub.s32 0, %v496
        %v498 = vrot.slane %v493, %v497
        %v499 = vlaneseq
        %v500 = vshrl.u32 %v499, 7
        %v501 = vsub.s32 1, %v500
        %v502 = vrot.slane %v493, %v501
        %v503 = vlaneseq
        %v504 = vshrl.u32 %v503, 7
        %v505 = vsub.s32 2, %v504
        %v506 = vrot.slane %v493, %v505
        %v507 = vlaneseq
        %v508 = vshrl.u32 %v507, 7
        %v509 = vsub.s32 3, %v508
        %v510 = vrot.slane %v493, %v509
        %v511 = vlaneseq
        %v512 = vshrl.u32 %v511, 7
        %v513 = vsub.s32 4, %v512
        %v514 = vrot.slane %v493, %v513
        %v515 = vlaneseq
        %v516 = vshrl.u32 %v515, 7
        %v517 = vsub.s32 5, %v516
        %v518 = vrot.slane %v493, %v517
        %v519 = vlaneseq
        %v520 = vshrl.u32 %v519, 7
        %v521 = vsub.s32 6, %v520
        %v522 = vrot.slane %v493, %v521
        %v523 = vlaneseq
        %v524 = vshrl.u32 %v523, 7
        %v525 = vsub.s32 7, %v524
        %v526 = vrot.slane %v493, %v525
        %v535 = vadd.f32 %v429, %v498
        %v536 = vadd.f32 %v430, %v502
        %v537 = vadd.f32 %v431, %v506
        %v538 = vadd.f32 %v432, %v510
        %v539 = vadd.f32 %v433, %v514
        %v540 = vadd.f32 %v434, %v518
        %v541 = vadd.f32 %v435, %v522
        %v542 = vadd.f32 %v436, %v526
        %v543 = vadd.f32 %v437, %v498
        %v544 = vadd.f32 %v438, %v502
        %v545 = vadd.f32 %v439, %v506
        %v546 = vadd.f32 %v440, %v510
        %v547 = vadd.f32 %v441, %v514
        %v548 = vadd.f32 %v442, %v518
        %v549 = vadd.f32 %v443, %v522
        %v550 = vadd.f32 %v444, %v526
        %v551 = vadd.f32 %v445, %v498
        %v552 = vadd.f32 %v446, %v502
        %v553 = vadd.f32 %v447, %v506
        %v554 = vadd.f32 %v448, %v510
        %v555 = vadd.f32 %v449, %v514
        %v556 = vadd.f32 %v450, %v518
        %v557 = vadd.f32 %v451, %v522
        %v558 = vadd.f32 %v452, %v526
        %v559 = vadd.f32 %v453, %v498
        %v560 = vadd.f32 %v454, %v502
        %v561 = vadd.f32 %v455, %v506
        %v562 = vadd.f32 %v456, %v510
        %v563 = vadd.f32 %v457, %v514
        %v564 = vadd.f32 %v458, %v518
        %v565 = vadd.f32 %v459, %v522
        %v566 = vadd.f32 %v460, %v526
        %v567 = vadd.f32 %v461, %v498
        %v568 = vadd.f32 %v462, %v502
        %v569 = vadd.f32 %v463, %v506
        %v570 = vadd.f32 %v464, %v510
        %v571 = vadd.f32 %v465, %v514
        %v572 = vadd.f32 %v466, %v518
        %v573 = vadd.f32 %v467, %v522
        %v574 = vadd.f32 %v468, %v526
        %v575 = vadd.f32 %v469, %v498
        %v576 = vadd.f32 %v470, %v502
        %v577 = vadd.f32 %v471, %v506
        %v578 = vadd.f32 %v472, %v510
        %v579 = vadd.f32 %v473, %v514
        %v580 = vadd.f32 %v474, %v518
        %v581 = vadd.f32 %v475, %v522
        %v582 = vadd.f32 %v476, %v526
        %v583 = vadd.f32 %v477, %v498
        %v584 = vadd.f32 %v478, %v502
        %v585 = vadd.f32 %v479, %v506
        %v586 = vadd.f32 %v480, %v510
        %v587 = vadd.f32 %v481, %v514
        %v588 = vadd.f32 %v482, %v518
        %v589 = vadd.f32 %v483, %v522
        %v590 = vadd.f32 %v484, %v526
        %v591 = vadd.f32 %v485, %v498
        %v592 = vadd.f32 %v486, %v502
        %v593 = vadd.f32 %v487, %v506
        %v594 = vadd.f32 %v488, %v510
        %v595 = vadd.f32 %v489, %v514
        %v596 = vadd.f32 %v490, %v518
        %v597 = vadd.f32 %v491, %v522
        %v598 = vadd.f32 %v492, %v526
        %v599 = vmax.f32 %v535, 0.0
        %v600 = vmax.f32 %v536, 0.0
        %v601 = vmax.f32 %v537, 0.0
        %v602 = vmax.f32 %v538, 0.0
        %v603 = vmax.f32 %v539, 0.0
        %v604 = vmax.f32 %v540, 0.0
        %v605 = vmax.f32 %v541, 0.0
        %v606 = vmax.f32 %v542, 0.0
        %v607 = vmax.f32 %v543, 0.0
        %v608 = vmax.f32 %v544, 0.0
        %v609 = vmax.f32 %v545, 0.0
        %v610 = vmax.f32 %v546, 0.0
        %v611 = vmax.f32 %v547, 0.0
        %v612 = vmax.f32 %v548, 0.0
        %v613 = vmax.f32 %v549, 0.0
        %v614 = vmax.f32 %v550, 0.0
        %v615 = vmax.f32 %v551, 0.0
        %v616 = vmax.f32 %v552, 0.0
        %v617 = vmax.f32 %v553, 0.0
        %v618 = vmax.f32 %v554, 0.0
        %v619 = vmax.f32 %v555, 0.0
        %v620 = vmax.f32 %v556, 0.0
        %v621 = vmax.f32 %v557, 0.0
        %v622 = vmax.f32 %v558, 0.0
        %v623 = vmax.f32 %v559, 0.0
        %v624 = vmax.f32 %v560, 0.0
        %v625 = vmax.f32 %v561, 0.0
        %v626 = vmax.f32 %v562, 0.0
        %v627 = vmax.f32 %v563, 0.0
        %v628 = vmax.f32 %v564, 0.0
        %v629 = vmax.f32 %v565, 0.0
        %v630 = vmax.f32 %v566, 0.0
        %v631 = vmax.f32 %v567, 0.0
        %v632 = vmax.f32 %v568, 0.0
        %v633 = vmax.f32 %v569, 0.0
        %v634 = vmax.f32 %v570, 0.0
        %v635 = vmax.f32 %v571, 0.0
        %v636 = vmax.f32 %v572, 0.0
        %v637 = vmax.f32 %v573, 0.0
        %v638 = vmax.f32 %v574, 0.0
        %v639 = vmax.f32 %v575, 0.0
        %v640 = vmax.f32 %v576, 0.0
        %v641 = vmax.f32 %v577, 0.0
        %v642 = vmax.f32 %v578, 0.0
        %v643 = vmax.f32 %v579, 0.0
        %v644 = vmax.f32 %v580, 0.0
        %v645 = vmax.f32 %v581, 0.0
        %v646 = vmax.f32 %v582, 0.0
        %v647 = vmax.f32 %v583, 0.0
        %v648 = vmax.f32 %v584, 0.0
        %v649 = vmax.f32 %v585, 0.0
        %v650 = vmax.f32 %v586, 0.0
        %v651 = vmax.f32 %v587, 0.0
        %v652 = vmax.f32 %v588, 0.0
        %v653 = vmax.f32 %v589, 0.0
        %v654 = vmax.f32 %v590, 0.0
        %v655 = vmax.f32 %v591, 0.0
        %v656 = vmax.f32 %v592, 0.0
        %v657 = vmax.f32 %v593, 0.0
        %v658 = vmax.f32 %v594, 0.0
        %v659 = vmax.f32 %v595, 0.0
        %v660 = vmax.f32 %v596, 0.0
        %v661 = vmax.f32 %v597, 0.0
        %v662 = vmax.f32 %v598, 0.0
        %v663 = vadd.f32 %v599, %v607
        %v664 = vadd.f32 %v663, %v615
        %v665 = vadd.f32 %v664, %v623
        %v666 = vrot.slane %v665, 4
        %v667 = vadd.f32 %v665, %v666
        %v668 = vrot.slane %v667, 2
        %v669 = vadd.f32 %v667, %v668
        %v670 = vrot.slane %v669, 1
        %v671 = vadd.f32 %v669, %v670
        %v672 = vadd.f32 %v600, %v608
        %v673 = vadd.f32 %v672, %v616
        %v674 = vadd.f32 %v673, %v624
        %v675 = vrot.slane %v674, 4
        %v676 = vadd.f32 %v674, %v675
        %v677 = vrot.slane %v676, 2
        %v678 = vadd.f32 %v676, %v677
        %v679 = vrot.slane %v678, 1
        %v680 = vadd.f32 %v678, %v679
        %v681 = vadd.f32 %v601, %v609
        %v682 = vadd.f32 %v681, %v617
        %v683 = vadd.f32 %v682, %v625
        %v684 = vrot.slane %v683, 4
        %v685 = vadd.f32 %v683, %v684
        %v686 = vrot.slane %v685, 2
        %v687 = vadd.f32 %v685, %v686
        %v688 = vrot.slane %v687, 1
        %v689 = vadd.f32 %v687, %v688
        %v690 = vadd.f32 %v602, %v610
        %v691 = vadd.f32 %v690, %v618
        %v692 = vadd.f32 %v691, %v626
        %v693 = vrot.slane %v692, 4
        %v694 = vadd.f32 %v692, %v693
        %v695 = vrot.slane %v694, 2
        %v696 = vadd.f32 %v694, %v695
        %v697 = vrot.slane %v696, 1
        %v698 = vadd.f32 %v696, %v697
        %v699 = vadd.f32 %v603, %v611
        %v700 = vadd.f32 %v699, %v619
        %v701 = vadd.f32 %v700, %v627
        %v702 = vrot.slane %v701, 4
        %v703 = vadd.f32 %v701, %v702
        %v704 = vrot.slane %v703, 2
        %v705 = vadd.f32 %v703, %v704
        %v706 = vrot.slane %v705, 1
        %v707 = vadd.f32 %v705, %v706
        %v708 = vadd.f32 %v604, %v612
        %v709 = vadd.f32 %v708, %v620
        %v710 = vadd.f32 %v709, %v628
        %v711 = vrot.slane %v710, 4
        %v712 = vadd.f32 %v710, %v711
        %v713 = vrot.slane %v712, 2
        %v714 = vadd.f32 %v712, %v713
        %v715 = vrot.slane %v714, 1
        %v716 = vadd.f32 %v714, %v715
        %v717 = vadd.f32 %v605, %v613
        %v718 = vadd.f32 %v717, %v621
        %v719 = vadd.f32 %v718, %v629
        %v720 = vrot.slane %v719, 4
        %v721 = vadd.f32 %v719, %v720
        %v722 = vrot.slane %v721, 2
        %v723 = vadd.f32 %v721, %v722
        %v724 = vrot.slane %v723, 1
        %v725 = vadd.f32 %v723, %v724
        %v726 = vadd.f32 %v606, %v614
        %v727 = vadd.f32 %v726, %v622
        %v728 = vadd.f32 %v727, %v630
        %v729 = vrot.slane %v728, 4
        %v730 = vadd.f32 %v728, %v729
        %v731 = vrot.slane %v730, 2
        %v732 = vadd.f32 %v730, %v731
        %v733 = vrot.slane %v732, 1
        %v734 = vadd.f32 %v732, %v733
        %v735 = vadd.f32 %v631, %v639
        %v736 = vadd.f32 %v735, %v647
        %v737 = vadd.f32 %v736, %v655
        %v738 = vrot.slane %v737, 4
        %v739 = vadd.f32 %v737, %v738
        %v740 = vrot.slane %v739, 2
        %v741 = vadd.f32 %v739, %v740
        %v742 = vrot.slane %v741, 1
        %v743 = vadd.f32 %v741, %v742
        %v744 = vadd.f32 %v632, %v640
        %v745 = vadd.f32 %v744, %v648
        %v746 = vadd.f32 %v745, %v656
        %v747 = vrot.slane %v746, 4
        %v748 = vadd.f32 %v746, %v747
        %v749 = vrot.slane %v748, 2
        %v750 = vadd.f32 %v748, %v749
        %v751 = vrot.slane %v750, 1
        %v752 = vadd.f32 %v750, %v751
        %v753 = vadd.f32 %v633, %v641
        %v754 = vadd.f32 %v753, %v649
        %v755 = vadd.f32 %v754, %v657
        %v756 = vrot.slane %v755, 4
        %v757 = vadd.f32 %v755, %v756
        %v758 = vrot.slane %v757, 2
        %v759 = vadd.f32 %v757, %v758
        %v760 = vrot.slane %v759, 1
        %v761 = vadd.f32 %v759, %v760
        %v762 = vadd.f32 %v634, %v642
        %v763 = vadd.f32 %v762, %v650
        %v764 = vadd.f32 %v763, %v658
        %v765 = vrot.slane %v764, 4
        %v766 = vadd.f32 %v764, %v765
        %v767 = vrot.slane %v766, 2
        %v768 = vadd.f32 %v766, %v767
        %v769 = vrot.slane %v768, 1
        %v770 = vadd.f32 %v768, %v769
        %v771 = vadd.f32 %v635, %v643
        %v772 = vadd.f32 %v771, %v651
        %v773 = vadd.f32 %v772, %v659
        %v774 = vrot.slane %v773, 4
        %v775 = vadd.f32 %v773, %v774
        %v776 = vrot.slane %v775, 2
        %v777 = vadd.f32 %v775, %v776
        %v778 = vrot.slane %v777, 1
        %v779 = vadd.f32 %v777, %v778
        %v780 = vadd.f32 %v636, %v644
        %v781 = vadd.f32 %v780, %v652
        %v782 = vadd.f32 %v781, %v660
        %v783 = vrot.slane %v782, 4
        %v784 = vadd.f32 %v782, %v783
        %v785 = vrot.slane %v784, 2
        %v786 = vadd.f32 %v784, %v785
        %v787 = vrot.slane %v786, 1
        %v788 = vadd.f32 %v786, %v787
        %v789 = vadd.f32 %v637, %v645
        %v790 = vadd.f32 %v789, %v653
        %v791 = vadd.f32 %v790, %v661
        %v792 = vrot.slane %v791, 4
        %v793 = vadd.f32 %v791, %v792
        %v794 = vrot.slane %v793, 2
        %v795 = vadd.f32 %v793, %v794
        %v796 = vrot.slane %v795, 1
        %v797 = vadd.f32 %v795, %v796
        %v798 = vadd.f32 %v638, %v646
        %v799 = vadd.f32 %v798, %v654
        %v800 = vadd.f32 %v799, %v662
        %v801 = vrot.slane %v800, 4
        %v802 = vadd.f32 %v800, %v801
        %v803 = vrot.slane %v802, 2
        %v804 = vadd.f32 %v802, %v803
        %v805 = vrot.slane %v804, 1
        %v806 = vadd.f32 %v804, %v805
        %v807 = vrcp.pop 32.0
        %v808 = vmul.f32 %v671, %v807
        %v809 = vmul.f32 %v680, %v807
        %v810 = vmul.f32 %v689, %v807
        %v811 = vmul.f32 %v698, %v807
        %v812 = vmul.f32 %v707, %v807
        %v813 = vmul.f32 %v716, %v807
        %v814 = vmul.f32 %v725, %v807
        %v815 = vmul.f32 %v734, %v807
        %v816 = vmul.f32 %v743, %v807
        %v817 = vmul.f32 %v752, %v807
        %v818 = vmul.f32 %v761, %v807
        %v819 = vmul.f32 %v770, %v807
        %v820 = vmul.f32 %v779, %v807
        %v821 = vmul.f32 %v788, %v807
        %v822 = vmul.f32 %v797, %v807
        %v823 = vmul.f32 %v806, %v807
        %v840 = vcombine.low %v808, %v809
        %v841 = vcombine.low %v810, %v811
        %v843 = vunpack.c.l.s4 1983009808
        %v844 = vunpack.c.0.s8 %v843
        %v845 = vlaneseq
        %v846 = vshrl.u32 %v845, 7
        %v847 = vsub.s32 %v844, %v846
        %v848 = vrot.slane %v840, %v847
        %v850 = vunpack.c.l.s4 1983009808
        %v851 = vunpack.c.0.s8 %v850
        %v852 = vlaneseq
        %v853 = vshrl.u32 %v852, 7
        %v854 = vsub.s32 %v851, %v853
        %v855 = vrot.slane %v841, %v854
        %v856 = vcombine.low %v848, %v855
        %v857 = vcombine.low %v812, %v813
        %v858 = vcombine.low %v814, %v815
        %v860 = vunpack.c.l.s4 1983009808
        %v861 = vunpack.c.0.s8 %v860
        %v862 = vlaneseq
        %v863 = vshrl.u32 %v862, 7
        %v864 = vsub.s32 %v861, %v863
        %v865 = vrot.slane %v857, %v864
        %v867 = vunpack.c.l.s4 1983009808
        %v868 = vunpack.c.0.s8 %v867
        %v869 = vlaneseq
        %v870 = vshrl.u32 %v869, 7
        %v871 = vsub.s32 %v868, %v870
        %v872 = vrot.slane %v858, %v871
        %v873 = vcombine.low %v865, %v872
        %v874 = vcombine.low %v816, %v817
        %v875 = vcombine.low %v818, %v819
        %v877 = vunpack.c.l.s4 1983009808
        %v878 = vunpack.c.0.s8 %v877
        %v879 = vlaneseq
        %v880 = vshrl.u32 %v879, 7
        %v881 = vsub.s32 %v878, %v880
        %v882 = vrot.slane %v874, %v881
        %v884 = vunpack.c.l.s4 1983009808
        %v885 = vunpack.c.0.s8 %v884
        %v886 = vlaneseq
        %v887 = vshrl.u32 %v886, 7
        %v888 = vsub.s32 %v885, %v887
        %v889 = vrot.slane %v875, %v888
        %v890 = vcombine.low %v882, %v889
        %v891 = vcombine.low %v820, %v821
        %v892 = vcombine.low %v822, %v823
        %v894 = vunpack.c.l.s4 1983009808
        %v895 = vunpack.c.0.s8 %v894
        %v896 = vlaneseq
        %v897 = vshrl.u32 %v896, 7
        %v898 = vsub.s32 %v895, %v897
        %v899 = vrot.slane %v891, %v898
        %v901 = vunpack.c.l.s4 1983009808
        %v902 = vunpack.c.0.s8 %v901
        %v903 = vlaneseq
        %v904 = vshrl.u32 %v903, 7
        %v905 = vsub.s32 %v902, %v904
        %v906 = vrot.slane %v892, %v905
        %v907 = vcombine.low %v899, %v906
        %vm908 = vcmask 1044484
        %v909 = vsel %vm908, %v856, %v856
        %vm910 = vcmask 1046534
        %v911 = vsel %vm910, %v856, %v909
        %v912 = vrot.slane %v890, 7
        %vm913 = vcmask 1041409
        %v914 = vsel %vm913, %v912, %v911
        %vm915 = vcmask 1043459
        %v916 = vsel %vm915, %v912, %v914
        %vm917 = vcmask 1045509
        %v918 = vsel %vm917, %v912, %v916
        %vm919 = vcmask 1047559
        %v920 = vsel %vm919, %v912, %v918
        %v921 = vsel %vm908, %v873, %v873
        %v922 = vsel %vm910, %v873, %v921
        %v923 = vrot.slane %v907, 7
        %v924 = vsel %vm913, %v923, %v922
        %v925 = vsel %vm915, %v923, %v924
        %v926 = vsel %vm917, %v923, %v925
        %v927 = vsel %vm919, %v923, %v926
        %930 = vst [vmem:[%s321] sm:$0xff] %v920
        %931 = vst [vmem:[%s321 + $0x8] sm:$0xff] %v927
        %v932 = vld [vmem:[#allocation8] sm:$0xff]
        %v933 = vld [vmem:[#allocation8 + $0x8] sm:$0xff]
        %v934 = vld [vmem:[#allocation8 + $0x10] sm:$0xff]
        %v935 = vld [vmem:[#allocation8 + $0x18] sm:$0xff]
        %v936 = vld [vmem:[#allocation8 + $0x20] sm:$0xff]
        %v937 = vld [vmem:[#allocation8 + $0x28] sm:$0xff]
        %v938 = vld [vmem:[#allocation8 + $0x30] sm:$0xff]
        %v939 = vld [vmem:[#allocation8 + $0x38] sm:$0xff]
        %v940 = vld [vmem:[#allocation8 + $0x40] sm:$0xff]
        %v941 = vld [vmem:[#allocation8 + $0x48] sm:$0xff]
        %v942 = vld [vmem:[#allocation8 + $0x50] sm:$0xff]
        %v943 = vld [vmem:[#allocation8 + $0x58] sm:$0xff]
        %v944 = vld [vmem:[#allocation8 + $0x60] sm:$0xff]
        %v945 = vld [vmem:[#allocation8 + $0x68] sm:$0xff]
        %v946 = vld [vmem:[#allocation8 + $0x70] sm:$0xff]
        %v947 = vld [vmem:[#allocation8 + $0x78] sm:$0xff]
        %v948 = vld [vmem:[#allocation8 + $0x80] sm:$0xff]
        %v949 = vld [vmem:[#allocation8 + $0x88] sm:$0xff]
        %v950 = vld [vmem:[#allocation8 + $0x90] sm:$0xff]
        %v951 = vld [vmem:[#allocation8 + $0x98] sm:$0xff]
        %v952 = vld [vmem:[#allocation8 + $0xa0] sm:$0xff]
        %v953 = vld [vmem:[#allocation8 + $0xa8] sm:$0xff]
        %v954 = vld [vmem:[#allocation8 + $0xb0] sm:$0xff]
        %v955 = vld [vmem:[#allocation8 + $0xb8] sm:$0xff]
        %v956 = vld [vmem:[#allocation8 + $0xc0] sm:$0xff]
        %v957 = vld [vmem:[#allocation8 + $0xc8] sm:$0xff]
        %v958 = vld [vmem:[#allocation8 + $0xd0] sm:$0xff]
        %v959 = vld [vmem:[#allocation8 + $0xd8] sm:$0xff]
        %v960 = vld [vmem:[#allocation8 + $0xe0] sm:$0xff]
        %v961 = vld [vmem:[#allocation8 + $0xe8] sm:$0xff]
        %v962 = vld [vmem:[#allocation8 + $0xf0] sm:$0xff]
        %v963 = vld [vmem:[#allocation8 + $0xf8] sm:$0xff]
        %v964 = vld [vmem:[#allocation8 + $0x100] sm:$0xff]
        %v965 = vld [vmem:[#allocation8 + $0x108] sm:$0xff]
        %v966 = vld [vmem:[#allocation8 + $0x110] sm:$0xff]
        %v967 = vld [vmem:[#allocation8 + $0x118] sm:$0xff]
        %v968 = vld [vmem:[#allocation8 + $0x120] sm:$0xff]
        %v969 = vld [vmem:[#allocation8 + $0x128] sm:$0xff]
        %v970 = vld [vmem:[#allocation8 + $0x130] sm:$0xff]
        %v971 = vld [vmem:[#allocation8 + $0x138] sm:$0xff]
        %v972 = vld [vmem:[#allocation8 + $0x140] sm:$0xff]
        %v973 = vld [vmem:[#allocation8 + $0x148] sm:$0xff]
        %v974 = vld [vmem:[#allocation8 + $0x150] sm:$0xff]
        %v975 = vld [vmem:[#allocation8 + $0x158] sm:$0xff]
        %v976 = vld [vmem:[#allocation8 + $0x160] sm:$0xff]
        %v977 = vld [vmem:[#allocation8 + $0x168] sm:$0xff]
        %v978 = vld [vmem:[#allocation8 + $0x170] sm:$0xff]
        %v979 = vld [vmem:[#allocation8 + $0x178] sm:$0xff]
        %v980 = vld [vmem:[#allocation8 + $0x180] sm:$0xff]
        %v981 = vld [vmem:[#allocation8 + $0x188] sm:$0xff]
        %v982 = vld [vmem:[#allocation8 + $0x190] sm:$0xff]
        %v983 = vld [vmem:[#allocation8 + $0x198] sm:$0xff]
        %v984 = vld [vmem:[#allocation8 + $0x1a0] sm:$0xff]
        %v985 = vld [vmem:[#allocation8 + $0x1a8] sm:$0xff]
        %v986 = vld [vmem:[#allocation8 + $0x1b0] sm:$0xff]
        %v987 = vld [vmem:[#allocation8 + $0x1b8] sm:$0xff]
        %v988 = vld [vmem:[#allocation8 + $0x1c0] sm:$0xff]
        %v989 = vld [vmem:[#allocation8 + $0x1c8] sm:$0xff]
        %v990 = vld [vmem:[#allocation8 + $0x1d0] sm:$0xff]
        %v991 = vld [vmem:[#allocation8 + $0x1d8] sm:$0xff]
        %v992 = vld [vmem:[#allocation8 + $0x1e0] sm:$0xff]
        %v993 = vld [vmem:[#allocation8 + $0x1e8] sm:$0xff]
        %v994 = vld [vmem:[#allocation8 + $0x1f0] sm:$0xff]
        %v995 = vld [vmem:[#allocation8 + $0x1f8] sm:$0xff]
        %v996 = vld [vmem:[#allocation8 + $0x200] sm:$0xff]
        %v997 = vld [vmem:[#allocation8 + $0x208] sm:$0xff]
        %v998 = vld [vmem:[#allocation8 + $0x210] sm:$0xff]
        %v999 = vld [vmem:[#allocation8 + $0x218] sm:$0xff]
        %v1000 = vld [vmem:[#allocation8 + $0x220] sm:$0xff]
        %v1001 = vld [vmem:[#allocation8 + $0x228] sm:$0xff]
        %v1002 = vld [vmem:[#allocation8 + $0x230] sm:$0xff]
        %v1003 = vld [vmem:[#allocation8 + $0x238] sm:$0xff]
        %v1004 = vld [vmem:[#allocation8 + $0x240] sm:$0xff]
        %v1005 = vld [vmem:[#allocation8 + $0x248] sm:$0xff]
        %v1006 = vld [vmem:[#allocation8 + $0x250] sm:$0xff]
        %v1007 = vld [vmem:[#allocation8 + $0x258] sm:$0xff]
        %v1008 = vld [vmem:[#allocation8 + $0x260] sm:$0xff]
        %v1009 = vld [vmem:[#allocation8 + $0x268] sm:$0xff]
        %v1010 = vld [vmem:[#allocation8 + $0x270] sm:$0xff]
        %v1011 = vld [vmem:[#allocation8 + $0x278] sm:$0xff]
        %v1012 = vld [vmem:[#allocation8 + $0x280] sm:$0xff]
        %v1013 = vld [vmem:[#allocation8 + $0x288] sm:$0xff]
        %v1014 = vld [vmem:[#allocation8 + $0x290] sm:$0xff]
        %v1015 = vld [vmem:[#allocation8 + $0x298] sm:$0xff]
        %v1016 = vld [vmem:[#allocation8 + $0x2a0] sm:$0xff]
        %v1017 = vld [vmem:[#allocation8 + $0x2a8] sm:$0xff]
        %v1018 = vld [vmem:[#allocation8 + $0x2b0] sm:$0xff]
        %v1019 = vld [vmem:[#allocation8 + $0x2b8] sm:$0xff]
        %v1020 = vld [vmem:[#allocation8 + $0x2c0] sm:$0xff]
        %v1021 = vld [vmem:[#allocation8 + $0x2c8] sm:$0xff]
        %v1022 = vld [vmem:[#allocation8 + $0x2d0] sm:$0xff]
        %v1023 = vld [vmem:[#allocation8 + $0x2d8] sm:$0xff]
        %v1024 = vld [vmem:[#allocation8 + $0x2e0] sm:$0xff]
        %v1025 = vld [vmem:[#allocation8 + $0x2e8] sm:$0xff]
        %v1026 = vld [vmem:[#allocation8 + $0x2f0] sm:$0xff]
        %v1027 = vld [vmem:[#allocation8 + $0x2f8] sm:$0xff]
        %v1028 = vld [vmem:[#allocation8 + $0x300] sm:$0xff]
        %v1029 = vld [vmem:[#allocation8 + $0x308] sm:$0xff]
        %v1030 = vld [vmem:[#allocation8 + $0x310] sm:$0xff]
        %v1031 = vld [vmem:[#allocation8 + $0x318] sm:$0xff]
        %v1032 = vld [vmem:[#allocation8 + $0x320] sm:$0xff]
        %v1033 = vld [vmem:[#allocation8 + $0x328] sm:$0xff]
        %v1034 = vld [vmem:[#allocation8 + $0x330] sm:$0xff]
        %v1035 = vld [vmem:[#allocation8 + $0x338] sm:$0xff]
        %v1036 = vld [vmem:[#allocation8 + $0x340] sm:$0xff]
        %v1037 = vld [vmem:[#allocation8 + $0x348] sm:$0xff]
        %v1038 = vld [vmem:[#allocation8 + $0x350] sm:$0xff]
        %v1039 = vld [vmem:[#allocation8 + $0x358] sm:$0xff]
        %v1040 = vld [vmem:[#allocation8 + $0x360] sm:$0xff]
        %v1041 = vld [vmem:[#allocation8 + $0x368] sm:$0xff]
        %v1042 = vld [vmem:[#allocation8 + $0x370] sm:$0xff]
        %v1043 = vld [vmem:[#allocation8 + $0x378] sm:$0xff]
        %v1044 = vld [vmem:[#allocation8 + $0x380] sm:$0xff]
        %v1045 = vld [vmem:[#allocation8 + $0x388] sm:$0xff]
        %v1046 = vld [vmem:[#allocation8 + $0x390] sm:$0xff]
        %v1047 = vld [vmem:[#allocation8 + $0x398] sm:$0xff]
        %v1048 = vld [vmem:[#allocation8 + $0x3a0] sm:$0xff]
        %v1049 = vld [vmem:[#allocation8 + $0x3a8] sm:$0xff]
        %v1050 = vld [vmem:[#allocation8 + $0x3b0] sm:$0xff]
        %v1051 = vld [vmem:[#allocation8 + $0x3b8] sm:$0xff]
        %v1052 = vld [vmem:[#allocation8 + $0x3c0] sm:$0xff]
        %v1053 = vld [vmem:[#allocation8 + $0x3c8] sm:$0xff]
        %v1054 = vld [vmem:[#allocation8 + $0x3d0] sm:$0xff]
        %v1055 = vld [vmem:[#allocation8 + $0x3d8] sm:$0xff]
        %v1056 = vld [vmem:[#allocation8 + $0x3e0] sm:$0xff]
        %v1057 = vld [vmem:[#allocation8 + $0x3e8] sm:$0xff]
        %v1058 = vld [vmem:[#allocation8 + $0x3f0] sm:$0xff]
        %v1059 = vld [vmem:[#allocation8 + $0x3f8] sm:$0xff]
        %v1060 = vld [vmem:[%s4] sm:$0x1]
        %v1062 = vlaneseq
        %v1063 = vshrl.u32 %v1062, 7
        %v1064 = vsub.s32 0, %v1063
        %v1065 = vrot.slane %v1060, %v1064
        %v1067 = vsel %vm913, %v816, %v808
        %v1068 = vsel %vm913, %v817, %v809
        %v1069 = vsel %vm913, %v818, %v810
        %v1070 = vsel %vm913, %v819, %v811
        %v1071 = vsel %vm913, %v820, %v812
        %v1072 = vsel %vm913, %v821, %v813
        %v1073 = vsel %vm913, %v822, %v814
        %v1074 = vsel %vm913, %v823, %v815
        %1083 = vmatprep.subr.mxu0 0.0
        %1084 = vmatpush1.msra.mxu0 %v932
        %1085 = vmatprep.subr.mxu0 0.0
        %1086 = vmatpush1.msra.mxu0 %v933
        %1087 = vmatprep.subr.mxu0 0.0
        %1088 = vmatpush1.msra.mxu0 %v934
        %1089 = vmatprep.subr.mxu0 0.0
        %1090 = vmatpush1.msra.mxu0 %v935
        %1091 = vmatprep.subr.mxu0 0.0
        %1092 = vmatpush1.msra.mxu0 %v936
        %1093 = vmatprep.subr.mxu0 0.0
        %1094 = vmatpush1.msra.mxu0 %v937
        %1095 = vmatprep.subr.mxu0 0.0
        %1096 = vmatpush1.msra.mxu0 %v938
        %1097 = vmatprep.subr.mxu0 0.0
        %1098 = vmatpush1.msra.mxu0 %v939
        %1099 = vmatprep.subr.mxu0 0.0
        %1100 = vmatpush1.msra.mxu0 %v940
        %1101 = vmatprep.subr.mxu0 0.0
        %1102 = vmatpush1.msra.mxu0 %v941
        %1103 = vmatprep.subr.mxu0 0.0
        %1104 = vmatpush1.msra.mxu0 %v942
        %1105 = vmatprep.subr.mxu0 0.0
        %1106 = vmatpush1.msra.mxu0 %v943
        %1107 = vmatprep.subr.mxu0 0.0
        %1108 = vmatpush1.msra.mxu0 %v944
        %1109 = vmatprep.subr.mxu0 0.0
        %1110 = vmatpush1.msra.mxu0 %v945
        %1111 = vmatprep.subr.mxu0 0.0
        %1112 = vmatpush1.msra.mxu0 %v946
        %1113 = vmatprep.subr.mxu0 0.0
        %1114 = vmatpush1.msra.mxu0 %v947
        %1115 = vmatprep.subr.mxu0 0.0
        %1116 = vmatpush1.msra.mxu0 %v948
        %1117 = vmatprep.subr.mxu0 0.0
        %1118 = vmatpush1.msra.mxu0 %v949
        %1119 = vmatprep.subr.mxu0 0.0
        %1120 = vmatpush1.msra.mxu0 %v950
        %1121 = vmatprep.subr.mxu0 0.0
        %1122 = vmatpush1.msra.mxu0 %v951
        %1123 = vmatprep.subr.mxu0 0.0
        %1124 = vmatpush1.msra.mxu0 %v952
        %1125 = vmatprep.subr.mxu0 0.0
        %1126 = vmatpush1.msra.mxu0 %v953
        %1127 = vmatprep.subr.mxu0 0.0
        %1128 = vmatpush1.msra.mxu0 %v954
        %1129 = vmatprep.subr.mxu0 0.0
        %1130 = vmatpush1.msra.mxu0 %v955
        %1131 = vmatprep.subr.mxu0 0.0
        %1132 = vmatpush1.msra.mxu0 %v956
        %1133 = vmatprep.subr.mxu0 0.0
        %1134 = vmatpush1.msra.mxu0 %v957
        %1135 = vmatprep.subr.mxu0 0.0
        %1136 = vmatpush1.msra.mxu0 %v958
        %1137 = vmatprep.subr.mxu0 0.0
        %1138 = vmatpush1.msra.mxu0 %v959
        %1139 = vmatprep.subr.mxu0 0.0
        %1140 = vmatpush1.msra.mxu0 %v960
        %1141 = vmatprep.subr.mxu0 0.0
        %1142 = vmatpush1.msra.mxu0 %v961
        %1143 = vmatprep.subr.mxu0 0.0
        %1144 = vmatpush1.msra.mxu0 %v962
        %1145 = vmatprep.subr.mxu0 0.0
        %1146 = vmatpush1.msra.mxu0 %v963
        %1147 = vmatprep.mubr.f32.mxu0 %v1068
        %1148 = vmatmul.mubr.f32.gmra.mrb[0].mxu0 %v1067
        %v1149 = vpop.f32.mrb[0].mxu0
        %v1150 = vadd.f32 %v1065, %v1149
        %v1151 = vpop.f32.mrb[0].mxu0
        %1152 = vdwg.mxu0
        %1153 = vmatprep.subr.mxu0 0.0
        %1154 = vmatpush1.msra.mxu0 %v964
        %1155 = vmatprep.subr.mxu0 0.0
        %1156 = vmatpush1.msra.mxu0 %v965
        %1157 = vmatprep.subr.mxu0 0.0
        %1158 = vmatpush1.msra.mxu0 %v966
        %1159 = vmatprep.subr.mxu0 0.0
        %1160 = vmatpush1.msra.mxu0 %v967
        %1161 = vmatprep.subr.mxu0 0.0
        %1162 = vmatpush1.msra.mxu0 %v968
        %1163 = vmatprep.subr.mxu0 0.0
        %1164 = vmatpush1.msra.mxu0 %v969
        %1165 = vmatprep.subr.mxu0 0.0
        %1166 = vmatpush1.msra.mxu0 %v970
        %1167 = vmatprep.subr.mxu0 0.0
        %1168 = vmatpush1.msra.mxu0 %v971
        %1169 = vmatprep.subr.mxu0 0.0
        %1170 = vmatpush1.msra.mxu0 %v972
        %1171 = vmatprep.subr.mxu0 0.0
        %1172 = vmatpush1.msra.mxu0 %v973
        %1173 = vmatprep.subr.mxu0 0.0
        %1174 = vmatpush1.msra.mxu0 %v974
        %1175 = vmatprep.subr.mxu0 0.0
        %1176 = vmatpush1.msra.mxu0 %v975
        %1177 = vmatprep.subr.mxu0 0.0
        %1178 = vmatpush1.msra.mxu0 %v976
        %1179 = vmatprep.subr.mxu0 0.0
        %1180 = vmatpush1.msra.mxu0 %v977
        %1181 = vmatprep.subr.mxu0 0.0
        %1182 = vmatpush1.msra.mxu0 %v978
        %1183 = vmatprep.subr.mxu0 0.0
        %1184 = vmatpush1.msra.mxu0 %v979
        %1185 = vmatprep.subr.mxu0 0.0
        %1186 = vmatpush1.msra.mxu0 %v980
        %1187 = vmatprep.subr.mxu0 0.0
        %1188 = vmatpush1.msra.mxu0 %v981
        %1189 = vmatprep.subr.mxu0 0.0
        %1190 = vmatpush1.msra.mxu0 %v982
        %1191 = vmatprep.subr.mxu0 0.0
        %1192 = vmatpush1.msra.mxu0 %v983
        %1193 = vmatprep.subr.mxu0 0.0
        %1194 = vmatpush1.msra.mxu0 %v984
        %1195 = vmatprep.subr.mxu0 0.0
        %1196 = vmatpush1.msra.mxu0 %v985
        %1197 = vmatprep.subr.mxu0 0.0
        %1198 = vmatpush1.msra.mxu0 %v986
        %1199 = vmatprep.subr.mxu0 0.0
        %1200 = vmatpush1.msra.mxu0 %v987
        %1201 = vmatprep.subr.mxu0 0.0
        %1202 = vmatpush1.msra.mxu0 %v988
        %1203 = vmatprep.subr.mxu0 0.0
        %1204 = vmatpush1.msra.mxu0 %v989
        %1205 = vmatprep.subr.mxu0 0.0
        %1206 = vmatpush1.msra.mxu0 %v990
        %1207 = vmatprep.subr.mxu0 0.0
        %1208 = vmatpush1.msra.mxu0 %v991
        %1209 = vmatprep.subr.mxu0 0.0
        %1210 = vmatpush1.msra.mxu0 %v992
        %1211 = vmatprep.subr.mxu0 0.0
        %1212 = vmatpush1.msra.mxu0 %v993
        %1213 = vmatprep.subr.mxu0 0.0
        %1214 = vmatpush1.msra.mxu0 %v994
        %1215 = vmatprep.subr.mxu0 0.0
        %1216 = vmatpush1.msra.mxu0 %v995
        %1217 = vmatprep.mubr.f32.mxu0 %v1070
        %1218 = vmatmul.mubr.f32.gmra.mrb[0].mxu0 %v1069
        %v1219 = vpop.f32.mrb[0].mxu0
        %v1220 = vadd.f32 %v1150, %v1219
        %v1221 = vpop.f32.mrb[0].mxu0
        %1222 = vdwg.mxu0
        %1223 = vmatprep.subr.mxu0 0.0
        %1224 = vmatpush1.msra.mxu0 %v996
        %1225 = vmatprep.subr.mxu0 0.0
        %1226 = vmatpush1.msra.mxu0 %v997
        %1227 = vmatprep.subr.mxu0 0.0
        %1228 = vmatpush1.msra.mxu0 %v998
        %1229 = vmatprep.subr.mxu0 0.0
        %1230 = vmatpush1.msra.mxu0 %v999
        %1231 = vmatprep.subr.mxu0 0.0
        %1232 = vmatpush1.msra.mxu0 %v1000
        %1233 = vmatprep.subr.mxu0 0.0
        %1234 = vmatpush1.msra.mxu0 %v1001
        %1235 = vmatprep.subr.mxu0 0.0
        %1236 = vmatpush1.msra.mxu0 %v1002
        %1237 = vmatprep.subr.mxu0 0.0
        %1238 = vmatpush1.msra.mxu0 %v1003
        %1239 = vmatprep.subr.mxu0 0.0
        %1240 = vmatpush1.msra.mxu0 %v1004
        %1241 = vmatprep.subr.mxu0 0.0
        %1242 = vmatpush1.msra.mxu0 %v1005
        %1243 = vmatprep.subr.mxu0 0.0
        %1244 = vmatpush1.msra.mxu0 %v1006
        %1245 = vmatprep.subr.mxu0 0.0
        %1246 = vmatpush1.msra.mxu0 %v1007
        %1247 = vmatprep.subr.mxu0 0.0
        %1248 = vmatpush1.msra.mxu0 %v1008
        %1249 = vmatprep.subr.mxu0 0.0
        %1250 = vmatpush1.msra.mxu0 %v1009
        %1251 = vmatprep.subr.mxu0 0.0
        %1252 = vmatpush1.msra.mxu0 %v1010
        %1253 = vmatprep.subr.mxu0 0.0
        %1254 = vmatpush1.msra.mxu0 %v1011
        %1255 = vmatprep.subr.mxu0 0.0
        %1256 = vmatpush1.msra.mxu0 %v1012
        %1257 = vmatprep.subr.mxu0 0.0
        %1258 = vmatpush1.msra.mxu0 %v1013
        %1259 = vmatprep.subr.mxu0 0.0
        %1260 = vmatpush1.msra.mxu0 %v1014
        %1261 = vmatprep.subr.mxu0 0.0
        %1262 = vmatpush1.msra.mxu0 %v1015
        %1263 = vmatprep.subr.mxu0 0.0
        %1264 = vmatpush1.msra.mxu0 %v1016
        %1265 = vmatprep.subr.mxu0 0.0
        %1266 = vmatpush1.msra.mxu0 %v1017
        %1267 = vmatprep.subr.mxu0 0.0
        %1268 = vmatpush1.msra.mxu0 %v1018
        %1269 = vmatprep.subr.mxu0 0.0
        %1270 = vmatpush1.msra.mxu0 %v1019
        %1271 = vmatprep.subr.mxu0 0.0
        %1272 = vmatpush1.msra.mxu0 %v1020
        %1273 = vmatprep.subr.mxu0 0.0
        %1274 = vmatpush1.msra.mxu0 %v1021
        %1275 = vmatprep.subr.mxu0 0.0
        %1276 = vmatpush1.msra.mxu0 %v1022
        %1277 = vmatprep.subr.mxu0 0.0
        %1278 = vmatpush1.msra.mxu0 %v1023
        %1279 = vmatprep.subr.mxu0 0.0
        %1280 = vmatpush1.msra.mxu0 %v1024
        %1281 = vmatprep.subr.mxu0 0.0
        %1282 = vmatpush1.msra.mxu0 %v1025
        %1283 = vmatprep.subr.mxu0 0.0
        %1284 = vmatpush1.msra.mxu0 %v1026
        %1285 = vmatprep.subr.mxu0 0.0
        %1286 = vmatpush1.msra.mxu0 %v1027
        %1287 = vmatprep.mubr.f32.mxu0 %v1072
        %1288 = vmatmul.mubr.f32.gmra.mrb[0].mxu0 %v1071
        %v1289 = vpop.f32.mrb[0].mxu0
        %v1290 = vadd.f32 %v1220, %v1289
        %v1291 = vpop.f32.mrb[0].mxu0
        %1292 = vdwg.mxu0
        %1293 = vmatprep.subr.mxu0 0.0
        %1294 = vmatpush1.msra.mxu0 %v1028
        %1295 = vmatprep.subr.mxu0 0.0
        %1296 = vmatpush1.msra.mxu0 %v1029
        %1297 = vmatprep.subr.mxu0 0.0
        %1298 = vmatpush1.msra.mxu0 %v1030
        %1299 = vmatprep.subr.mxu0 0.0
        %1300 = vmatpush1.msra.mxu0 %v1031
        %1301 = vmatprep.subr.mxu0 0.0
        %1302 = vmatpush1.msra.mxu0 %v1032
        %1303 = vmatprep.subr.mxu0 0.0
        %1304 = vmatpush1.msra.mxu0 %v1033
        %1305 = vmatprep.subr.mxu0 0.0
        %1306 = vmatpush1.msra.mxu0 %v1034
        %1307 = vmatprep.subr.mxu0 0.0
        %1308 = vmatpush1.msra.mxu0 %v1035
        %1309 = vmatprep.subr.mxu0 0.0
        %1310 = vmatpush1.msra.mxu0 %v1036
        %1311 = vmatprep.subr.mxu0 0.0
        %1312 = vmatpush1.msra.mxu0 %v1037
        %1313 = vmatprep.subr.mxu0 0.0
        %1314 = vmatpush1.msra.mxu0 %v1038
        %1315 = vmatprep.subr.mxu0 0.0
        %1316 = vmatpush1.msra.mxu0 %v1039
        %1317 = vmatprep.subr.mxu0 0.0
        %1318 = vmatpush1.msra.mxu0 %v1040
        %1319 = vmatprep.subr.mxu0 0.0
        %1320 = vmatpush1.msra.mxu0 %v1041
        %1321 = vmatprep.subr.mxu0 0.0
        %1322 = vmatpush1.msra.mxu0 %v1042
        %1323 = vmatprep.subr.mxu0 0.0
        %1324 = vmatpush1.msra.mxu0 %v1043
        %1325 = vmatprep.subr.mxu0 0.0
        %1326 = vmatpush1.msra.mxu0 %v1044
        %1327 = vmatprep.subr.mxu0 0.0
        %1328 = vmatpush1.msra.mxu0 %v1045
        %1329 = vmatprep.subr.mxu0 0.0
        %1330 = vmatpush1.msra.mxu0 %v1046
        %1331 = vmatprep.subr.mxu0 0.0
        %1332 = vmatpush1.msra.mxu0 %v1047
        %1333 = vmatprep.subr.mxu0 0.0
        %1334 = vmatpush1.msra.mxu0 %v1048
        %1335 = vmatprep.subr.mxu0 0.0
        %1336 = vmatpush1.msra.mxu0 %v1049
        %1337 = vmatprep.subr.mxu0 0.0
        %1338 = vmatpush1.msra.mxu0 %v1050
        %1339 = vmatprep.subr.mxu0 0.0
        %1340 = vmatpush1.msra.mxu0 %v1051
        %1341 = vmatprep.subr.mxu0 0.0
        %1342 = vmatpush1.msra.mxu0 %v1052
        %1343 = vmatprep.subr.mxu0 0.0
        %1344 = vmatpush1.msra.mxu0 %v1053
        %1345 = vmatprep.subr.mxu0 0.0
        %1346 = vmatpush1.msra.mxu0 %v1054
        %1347 = vmatprep.subr.mxu0 0.0
        %1348 = vmatpush1.msra.mxu0 %v1055
        %1349 = vmatprep.subr.mxu0 0.0
        %1350 = vmatpush1.msra.mxu0 %v1056
        %1351 = vmatprep.subr.mxu0 0.0
        %1352 = vmatpush1.msra.mxu0 %v1057
        %1353 = vmatprep.subr.mxu0 0.0
        %1354 = vmatpush1.msra.mxu0 %v1058
        %1355 = vmatprep.subr.mxu0 0.0
        %1356 = vmatpush1.msra.mxu0 %v1059
        %1357 = vmatprep.mubr.f32.mxu0 %v1074
        %1358 = vmatmul.mubr.f32.gmra.mrb[0].mxu0 %v1073
        %v1359 = vpop.f32.mrb[0].mxu0
        %v1360 = vadd.f32 %v1290, %v1359
        %v1361 = vpop.f32.mrb[0].mxu0
        %1362 = vdwg.mxu0
        %1363 = vst [vmem:[%s314] sm:$0x3] %v1360
        %s1364 = sand.u32 %s147, 1
        %s1365 = scalar_lea.sflag [#allocation4], %s1364
        %s1366 = sand.u32 %s147, 1
        %s1367 = smul.addr %s1366, 2
        %s1368 = scalar_lea.vmem [#allocation10], %s1367
        %s1369 = sand.u32 %s173, 1
        %s1370 = scalar_lea.sflag [#allocation12], %s1369
        %s1371 = sand.u32 %s173, 1
        %s1372 = smul.addr %s1371, 16
        %s1373 = scalar_lea.vmem [#allocation11], %s1372
        // Predicated region
        $region57: #{tpu_custom_call.1} parent=39 // pred_check
          %p1374 = pneg %p157
        $region58: #{tpu_custom_call.1} parent=39 // pred_check_branch
          %1376 = sbr.rel (%p1374) target = $region60
        $region59: #{tpu_custom_call.1} parent=39 // pred_region
          %s1378 = ssub.s32 32, 32
          %1379 = vsyncadd %s1365, %s1378
          %s1380 = smul.addr %s29, 32
          %s1381 = scalar_lea.hbm %s5, %s1380
          %s1383 = sshll.u32 %s1368, 4
          %s1384 = int_to_ptr.vmem [resolvable:$true] %s1383
          %1386 = dma.vmem_to_hbm [thread:$0]  %s1384, 32, %s1381, %s1365
        $region60: #{tpu_custom_call.1} parent=39 // pred_fallthru
          _
        // Predicated region
        $region61: #{tpu_custom_call.1} parent=39 // pred_check
          %p1387 = pneg %p183
        $region62: #{tpu_custom_call.1} parent=39 // pred_check_branch
          %1389 = sbr.rel (%p1387) target = $region64
        $region63: #{tpu_custom_call.1} parent=39 // pred_region
          %s1391 = ssub.s32 256, 256
          %1392 = vsyncadd %s1370, %s1391
          %s1393 = smul.addr %s29, 8
          %s1394 = smul.addr %s1393, 32
          %s1395 = scalar_lea.hbm %s6, %s1394
          %s1397 = sshll.u32 %s1373, 4
          %s1398 = int_to_ptr.vmem [resolvable:$true] %s1397
          %1400 = dma.vmem_to_hbm [thread:$0]  %s1398, 256, %s1395, %s1370
        $region64: #{tpu_custom_call.1} parent=39 // pred_fallthru
          _
      $region40: #{tpu_custom_call.1} parent=5 // pred_fallthru
        _
      %p1401 = scmp.le.s32.totalorder 2, %s24
      // Predicated region
      $region65: #{tpu_custom_call.1} parent=5 // pred_check
        %p1402 = pneg %p1401
      $region66: #{tpu_custom_call.1} parent=5 // pred_check_branch
        %1404 = sbr.rel (%p1402) target = $region68
      $region67: #{tpu_custom_call.1} parent=5 // pred_region
        %s1405 = ssub.s32 %s24, 2
        // Predicated region
        $region69: #{tpu_custom_call.1} parent=67 // pred_check
          %p1406 = pneg %p163
        $region70: #{tpu_custom_call.1} parent=67 // pred_check_branch
          %1408 = sbr.rel (%p1406) target = $region72
        $region71: #{tpu_custom_call.1} parent=67 // pred_region
          %s1409 = sand.u32 %s148, 1
          %s1410 = scalar_lea.sflag [#allocation4], %s1409
          %s1411 = sand.u32 %s148, 1
          %s1412 = smul.addr %s1411, 2
          %s1413 = scalar_lea.vmem [#allocation10], %s1412
          %1414 = dma.done %s1410, 32
        $region72: #{tpu_custom_call.1} parent=67 // pred_fallthru
          _
        // Predicated region
        $region73: #{tpu_custom_call.1} parent=67 // pred_check
          %p1415 = pneg %p189
        $region74: #{tpu_custom_call.1} parent=67 // pred_check_branch
          %1417 = sbr.rel (%p1415) target = $region76
        $region75: #{tpu_custom_call.1} parent=67 // pred_region
          %s1418 = sand.u32 %s174, 1
          %s1419 = scalar_lea.sflag [#allocation12], %s1418
          %s1420 = sand.u32 %s174, 1
          %s1421 = smul.addr %s1420, 16
          %s1422 = scalar_lea.vmem [#allocation11], %s1421
          %1423 = dma.done %s1419, 256
        $region76: #{tpu_custom_call.1} parent=67 // pred_fallthru
          _
      $region68: #{tpu_custom_call.1} parent=5 // pred_fallthru
        _
    $region6: #{tpu_custom_call.1} parent=1 // loop_footer
      %s28 = sadd.s32 1, %s24
    $region7: #{tpu_custom_call.1} parent=1 // loop_footer_branch
      %23 = sbr.rel target = $region3
    $region8: #{tpu_custom_call.1} parent=1 // loop_exit
      _
    %1424 = vsyncpa [#allocation3], 1
    %s1425 = scalar_lea.sflag [#allocation3], 1
    %1426 = vsyncpa %s1425, 1
    %1427 = vsyncpa [#allocation6], 1
    %1428 = vsyncpa [#allocation9], 1
    %1429 = vsyncpa [#allocation4], 1
    %s1430 = scalar_lea.sflag [#allocation4], 1
    %1431 = vsyncpa %s1430, 1
    %1432 = vsyncpa [#allocation12], 1
    %s1433 = scalar_lea.sflag [#allocation12], 1
    %1434 = vsyncpa %s1433, 1

</llo_original>
